<compile_context>
chip_gen: v6e
topology: v6e:2x2x1
jax: 0.10.0
libtpu: 0.0.40
codegen_flags: <defaults>
</compile_context>

<pallas_src>
import math

import jax
import jax.numpy as jnp
from jax.experimental import pallas as pl
from jax.experimental.pallas import tpu as pltpu

# ----------------------------- config ----------------------------------------
B = 2              # batch
S = 8              # sequence length
H = 32             # hidden size (logical)
NH = 2             # attention heads
HD = H // NH       # head dim (logical)
I = 64             # intermediate (FFN) size (logical)
L = 2              # encoder layers
VOCAB = 100
TYPE_VOCAB = 2
MAX_POS = 66
PAD_ID = 1
LN_EPS = 1e-5
DTYPE_MIN = float(jnp.finfo(jnp.float32).min)

# padded (lane-dense) kernel dims
BS = B * S         # 16 rows (flattened batch*seq)
HP = 128           # padded hidden
IP = 128           # padded intermediate
HDP = HP // NH     # padded head dim (64)

# packed bias/LN row indices inside the (L, 16, HP) array
# 0:bq 1:bk 2:bv 3:bo 4:ln1_g 5:ln1_b 6:bi 7:bo2 8:ln2_g 9:ln2_b (10..15 zero)


# --------------------------- fused Pallas kernel ------------------------------
def fused_roberta_kernel(emb_ref, mask_ref, embln_ref, pool_ref,
                         wslab_ref, bvec_ref, seq_ref, pooled_ref):
    # lane mask for the true hidden width (padded lanes >= H are exactly zero)
    lane = jax.lax.broadcasted_iota(jnp.int32, (1, HP), 1)
    colmask = (lane < H).astype(jnp.float32)

    inv_h = 1.0 / H

    def layernorm(x, g, b):
        # centered-form variance; padded lanes masked out of the statistics.
        mu = jnp.sum(x, axis=-1, keepdims=True) * inv_h
        xc = (x - mu) * colmask
        var = jnp.sum(xc * xc, axis=-1, keepdims=True) * inv_h
        # g/b are zero in padded lanes -> padded outputs stay exactly zero.
        return xc * jax.lax.rsqrt(var + LN_EPS) * g + b

    def erf(x):
        # Abramowitz & Stegun 7.1.26, max abs error ~1.5e-7 (exp/mul/where only).
        a1, a2, a3, a4, a5 = (0.254829592, -0.284496736, 1.421413741,
                              -1.453152027, 1.061405429)
        p = 0.3275911
        sgn = jnp.where(x < 0.0, -1.0, 1.0)
        ax = jnp.abs(x)
        t = 1.0 / (1.0 + p * ax)
        poly = ((((a5 * t + a4) * t + a3) * t + a2) * t + a1) * t
        return sgn * (1.0 - poly * jnp.exp(-ax * ax))

    def gelu(x):
        # exact (erf) GELU, matching HF roberta-base
        return 0.5 * x * (1.0 + erf(x * (1.0 / math.sqrt(2.0))))

    mask = mask_ref[...]                                       # (NH*BS, BS) additive mask
    eln = embln_ref[...]                                       # (2, HP)
    x = layernorm(emb_ref[...], eln[0:1, :], eln[1:2, :])      # embedding LayerNorm

    scale = 1.0 / math.sqrt(HD)

    for l in range(L):                                         # static unroll over layers
        bmat = bvec_ref[l]                                     # (16, HP) f32 biases / LN params
        xb = x.astype(jnp.bfloat16)

        # fused QKV: one (BS,HP) x (HP,3HP) bf16 MXU matmul
        qkv = jnp.dot(xb, wslab_ref[l, 0:HP, :],
                      preferred_element_type=jnp.float32)      # (BS, 3HP) f32
        q = qkv[:, 0 * HP:1 * HP] + bmat[0:1, :]
        k = qkv[:, 1 * HP:2 * HP] + bmat[1:2, :]
        v = qkv[:, 2 * HP:3 * HP] + bmat[2:3, :]

        qb = q.astype(jnp.bfloat16)
        kb = k.astype(jnp.bfloat16)
        vb = v.astype(jnp.bfloat16)

        # per-head score matmuls, then ONE fused softmax on a (2*BS, BS) stack
        s0 = jax.lax.dot_general(qb[:, 0:HDP], kb[:, 0:HDP],
                                 (((1,), (1,)), ((), ())),
                                 preferred_element_type=jnp.float32)
        s1 = jax.lax.dot_general(qb[:, HDP:2 * HDP], kb[:, HDP:2 * HDP],
                                 (((1,), (1,)), ((), ())),
                                 preferred_element_type=jnp.float32)
        s = jnp.concatenate([s0, s1], axis=0) * scale + mask   # (2*BS, BS)
        s = s - jnp.max(s, axis=-1, keepdims=True)
        p = jnp.exp(s)
        p = p / jnp.sum(p, axis=-1, keepdims=True)             # exact softmax
        pb = p.astype(jnp.bfloat16)

        ctx0 = jnp.dot(pb[0:BS, :], vb[:, 0:HDP],
                       preferred_element_type=jnp.float32)     # (BS, HDP)
        ctx1 = jnp.dot(pb[BS:2 * BS, :], vb[:, HDP:2 * HDP],
                       preferred_element_type=jnp.float32)
        ctx = jnp.concatenate([ctx0, ctx1], axis=1)            # (BS, HP)

        attn = jnp.dot(ctx.astype(jnp.bfloat16), wslab_ref[l, HP:2 * HP, 0:HP],
                       preferred_element_type=jnp.float32) + bmat[3:4, :]
        h1 = layernorm(attn + x, bmat[4:5, :], bmat[5:6, :])

        inter = gelu(jnp.dot(h1.astype(jnp.bfloat16),
                             wslab_ref[l, HP:2 * HP, HP:2 * HP],
                             preferred_element_type=jnp.float32) + bmat[6:7, :])
        ffn = jnp.dot(inter.astype(jnp.bfloat16),
                      wslab_ref[l, HP:2 * HP, 2 * HP:3 * HP],
                      preferred_element_type=jnp.float32) + bmat[7:8, :]
        x = layernorm(ffn + h1, bmat[8:9, :], bmat[9:10, :])

    seq_ref[...] = x

    # pooler: only the CLS rows (row 0 and row S), padded to 8 sublanes
    cls = jnp.concatenate([x[0:1, :], x[S:S + 1, :],
                           jnp.zeros((8 - B, HP), jnp.float32)], axis=0)   # (8, HP)
    pw = pool_ref[0:HP, :]                                     # (HP, HP)
    pb2 = pool_ref[HP:HP + 1, :]                               # (1, HP)
    pooled_ref[...] = jnp.tanh(
        jnp.dot(cls, pw, preferred_element_type=jnp.float32) + pb2)


def run_fused(emb_pad, mask_full, embln, pool_pack, wslab, bvec):
    vmem = pl.BlockSpec(memory_space=pltpu.MemorySpace.VMEM)
    return pl.pallas_call(
        fused_roberta_kernel,
        out_shape=(jax.ShapeDtypeStruct((BS, HP), jnp.float32),   # hidden states
                   jax.ShapeDtypeStruct((8, HP), jnp.float32)),   # pooled (rows 0..B-1 live)
        in_specs=[vmem, vmem, vmem, vmem, vmem, vmem],
        out_specs=(vmem, vmem),
    )(emb_pad, mask_full, embln, pool_pack, wslab, bvec)


# --------------------------- parameter init (logical shapes) ------------------
def init_params(key):
    def nrm(k, shape, scale=0.02):
        return (scale * jax.random.normal(k, shape)).astype(jnp.float32)

    keys = jax.random.split(key, 8 + L * 8)
    ki = iter(range(len(keys)))

    params = {
        "word_emb": nrm(keys[next(ki)], (VOCAB, H)),
        "pos_emb": nrm(keys[next(ki)], (MAX_POS, H)),
        "type_emb": nrm(keys[next(ki)], (TYPE_VOCAB, H)),
        "emb_ln_g": jnp.ones((H,), jnp.float32),
        "emb_ln_b": jnp.zeros((H,), jnp.float32),
        "pool_w": nrm(keys[next(ki)], (H, H)),
        "pool_b": jnp.zeros((H,), jnp.float32),
        "layers": [],
    }
    for _ in range(L):
        layer = {
            "wq": nrm(keys[next(ki)], (H, H)), "bq": jnp.zeros((H,), jnp.float32),
            "wk": nrm(keys[next(ki)], (H, H)), "bk": jnp.zeros((H,), jnp.float32),
            "wv": nrm(keys[next(ki)], (H, H)), "bv": jnp.zeros((H,), jnp.float32),
            "wo": nrm(keys[next(ki)], (H, H)), "bo": jnp.zeros((H,), jnp.float32),
            "ln1_g": jnp.ones((H,), jnp.float32), "ln1_b": jnp.zeros((H,), jnp.float32),
            "wi": nrm(keys[next(ki)], (H, I)), "bi": jnp.zeros((I,), jnp.float32),
            "wo2": nrm(keys[next(ki)], (I, H)), "bo2": jnp.zeros((H,), jnp.float32),
            "ln2_g": jnp.ones((H,), jnp.float32), "ln2_b": jnp.zeros((H,), jnp.float32),
        }
        params["layers"].append(layer)
    return params


# --------------------------- pack / pad to kernel layout ----------------------
def pack_params(params):
    def pad_vec(v, n=HP):
        return jnp.zeros((n,), jnp.float32).at[:v.shape[0]].set(v)

    def pad_mat(w, r=HP, c=HP):
        return jnp.zeros((r, c), jnp.float32).at[:w.shape[0], :w.shape[1]].set(w)

    def pad_head_cols(w):            # (H, NH*HD) -> (HP, NH*HDP), per-head column blocks
        out = jnp.zeros((HP, HP), jnp.float32)
        for h in range(NH):
            out = out.at[:H, h * HDP:h * HDP + HD].set(w[:, h * HD:(h + 1) * HD])
        return out

    def pad_head_rows(w):            # (NH*HD, H) -> (NH*HDP, HP), per-head row blocks
        out = jnp.zeros((HP, HP), jnp.float32)
        for h in range(NH):
            out = out.at[h * HDP:h * HDP + HD, :H].set(w[h * HD:(h + 1) * HD, :])
        return out

    def pad_head_vec(v):             # (NH*HD,) -> (NH*HDP,)
        out = jnp.zeros((HP,), jnp.float32)
        for h in range(NH):
            out = out.at[h * HDP:h * HDP + HD].set(v[h * HD:(h + 1) * HD])
        return out

    slabs, bvec = [], []
    for lp in params["layers"]:
        top = jnp.concatenate(
            [pad_head_cols(lp["wq"]), pad_head_cols(lp["wk"]), pad_head_cols(lp["wv"])],
            axis=1)                                             # (HP, 3HP)  fused QKV
        bot = jnp.concatenate(
            [pad_head_rows(lp["wo"]), pad_mat(lp["wi"]), pad_mat(lp["wo2"])],
            axis=1)                                             # (HP, 3HP)  WO | WI | WO2
        slabs.append(jnp.concatenate([top, bot], axis=0))       # (2HP, 3HP)

        rows = [pad_head_vec(lp["bq"]), pad_head_vec(lp["bk"]), pad_head_vec(lp["bv"]),
                pad_vec(lp["bo"]), pad_vec(lp["ln1_g"]), pad_vec(lp["ln1_b"]),
                pad_vec(lp["bi"]), pad_vec(lp["bo2"]),
                pad_vec(lp["ln2_g"]), pad_vec(lp["ln2_b"])]
        rows += [jnp.zeros((HP,), jnp.float32)] * (16 - len(rows))
        bvec.append(jnp.stack(rows, axis=0))                    # (16, HP)

    packed = {
        "wslab": jnp.stack(slabs).astype(jnp.bfloat16),         # (L, 2HP, 3HP) bf16
        "bvec": jnp.stack(bvec),                                # (L, 16, HP) f32
        "embln": (jnp.zeros((2, HP), jnp.float32)
                  .at[0, :H].set(params["emb_ln_g"])
                  .at[1, :H].set(params["emb_ln_b"])),
        "pool": (jnp.zeros((HP + 8, HP), jnp.float32)
                 .at[:H, :H].set(params["pool_w"])
                 .at[HP, :H].set(params["pool_b"])),
        "word_emb": params["word_emb"],
        "pos_emb": params["pos_emb"],
        "type_emb": params["type_emb"],
    }
    return packed


# --------------------------- full forward -------------------------------------
def roberta_forward(packed, input_ids, attention_mask):
    """Mirrors TtRobertaModel.forward (encoder-only, add_pooling_layer=True,
    no head_mask / cross-attention / past_key_values)."""
    # --- extended attention mask: (1 - mask) * dtype_min, plus block-diagonal
    #     cross-batch masking because batch is flattened into the row dimension,
    #     tiled NH times along rows for the fused two-head softmax.
    key_add = ((1.0 - attention_mask.astype(jnp.float32)) * DTYPE_MIN).reshape(BS)
    batch_idx = jnp.arange(BS) // S
    same_batch = batch_idx[:, None] == batch_idx[None, :]
    mask_bs = jnp.where(same_batch, key_add[None, :], DTYPE_MIN)          # (BS, BS)
    mask_full = jnp.tile(mask_bs, (NH, 1))                                # (NH*BS, BS)

    # --- RoBERTa embeddings (gathers stay in plain JAX, as in the reference)
    pad_mask = (input_ids != PAD_ID).astype(jnp.int32)
    position_ids = jnp.cumsum(pad_mask, axis=1) * pad_mask + PAD_ID
    token_type_ids = jnp.zeros_like(input_ids)
    emb = (packed["word_emb"][input_ids]
           + packed["pos_emb"][position_ids]
           + packed["type_emb"][token_type_ids]).astype(jnp.float32)      # (B,S,H)
    emb_pad = jnp.zeros((BS, HP), jnp.float32).at[:, :H].set(emb.reshape(BS, H))

    # --- single fused kernel: emb LayerNorm + L encoder layers + pooler
    seq_pad, pooled_pad = run_fused(
        emb_pad, mask_full, packed["embln"], packed["pool"],
        packed["wslab"], packed["bvec"])

    sequence_output = seq_pad[:, :H].reshape(B, S, H)          # last_hidden_state
    pooled_output = pooled_pad[:B, :H]                         # CLS of each batch
    return sequence_output, pooled_output


# ------------------------------- main ------------------------------------------
if __name__ == "__main__":
    key = jax.random.PRNGKey(0)
    pkey, ikey = jax.random.split(key)

    params = init_params(pkey)
    packed = pack_params(params)

    input_ids = jax.random.randint(ikey, (B, S), 2, VOCAB, dtype=jnp.int32)
    # make the last two tokens of batch 0 padding, with matching attention mask
    input_ids = input_ids.at[0, -2:].set(PAD_ID)
    attention_mask = jnp.ones((B, S), jnp.float32).at[0, -2:].set(0.0)

    fwd = jax.jit(roberta_forward)
    seq_out, pooled_out = fwd(packed, input_ids, attention_mask)
    seq_out = jax.block_until_ready(seq_out)
    pooled_out = jax.block_until_ready(pooled_out)

    assert seq_out.shape == (B, S, H) and pooled_out.shape == (B, H)
    assert bool(jnp.all(jnp.isfinite(seq_out))) and bool(jnp.all(jnp.isfinite(pooled_out)))
    print("KERNEL_OK")
</pallas_src>

<mosaic_0001>
module attributes {stable_mosaic.version = 11 : i64} {
  func.func @fused_roberta_kernel(%arg0: memref<16x128xf32, #tpu.memory_space<vmem>>, %arg1: memref<32x16xf32, #tpu.memory_space<vmem>>, %arg2: memref<2x128xf32, #tpu.memory_space<vmem>>, %arg3: memref<136x128xf32, #tpu.memory_space<vmem>>, %arg4: memref<2x256x384xbf16, #tpu.memory_space<vmem>>, %arg5: memref<2x16x128xf32, #tpu.memory_space<vmem>>, %arg6: memref<16x128xf32, #tpu.memory_space<vmem>>, %arg7: memref<8x128xf32, #tpu.memory_space<vmem>>) attributes {dimension_semantics = [], scalar_prefetch = 0 : i64, scratch_operands = 0 : i64, tpu.core_type = #tpu.core_type<tc>} {
    %0 = tpu.iota {dimensions = array<i32: 1>} : vector<1x128xi32>
    %c32_i32 = arith.constant 32 : i32
    %1 = vector.broadcast %c32_i32 : i32 to vector<1x128xi32>
    %2 = arith.cmpi slt, %0, %1 : vector<1x128xi32>
    %3 = arith.extui %2 : vector<1x128xi1> to vector<1x128xi32>
    %4 = arith.sitofp %3 : vector<1x128xi32> to vector<1x128xf32>
    %c0 = arith.constant 0 : index
    %c0_0 = arith.constant 0 : index
    %5 = vector.load %arg1[%c0, %c0_0] : memref<32x16xf32, #tpu.memory_space<vmem>>, vector<32x16xf32>
    %c0_1 = arith.constant 0 : index
    %c0_2 = arith.constant 0 : index
    %6 = vector.load %arg2[%c0_1, %c0_2] : memref<2x128xf32, #tpu.memory_space<vmem>>, vector<2x128xf32>
    %c0_3 = arith.constant 0 : index
    %c0_4 = arith.constant 0 : index
    %7 = vector.load %arg0[%c0_3, %c0_4] : memref<16x128xf32, #tpu.memory_space<vmem>>, vector<16x128xf32>
    %8 = vector.extract_strided_slice %6 {offsets = [0, 0], sizes = [1, 128], strides = [1, 1]} : vector<2x128xf32> to vector<1x128xf32>
    %9 = vector.extract_strided_slice %6 {offsets = [1, 0], sizes = [1, 128], strides = [1, 1]} : vector<2x128xf32> to vector<1x128xf32>
    %cst = arith.constant dense<0.000000e+00> : vector<16xf32>
    %10 = vector.multi_reduction <add>, %7, %cst [1] : vector<16x128xf32> to vector<16xf32>
    %11 = vector.shape_cast %10 : vector<16xf32> to vector<16x1xf32>
    %cst_5 = arith.constant 3.125000e-02 : f32
    %12 = vector.broadcast %cst_5 : f32 to vector<16x1xf32>
    %13 = arith.mulf %11, %12 : vector<16x1xf32>
    %14 = vector.broadcast %13 : vector<16x1xf32> to vector<16x128xf32>
    %15 = arith.subf %7, %14 : vector<16x128xf32>
    %16 = vector.broadcast %4 : vector<1x128xf32> to vector<16x128xf32>
    %17 = arith.mulf %15, %16 : vector<16x128xf32>
    %18 = arith.mulf %17, %17 : vector<16x128xf32>
    %cst_6 = arith.constant dense<0.000000e+00> : vector<16xf32>
    %19 = vector.multi_reduction <add>, %18, %cst_6 [1] : vector<16x128xf32> to vector<16xf32>
    %20 = vector.shape_cast %19 : vector<16xf32> to vector<16x1xf32>
    %cst_7 = arith.constant 3.125000e-02 : f32
    %21 = vector.broadcast %cst_7 : f32 to vector<16x1xf32>
    %22 = arith.mulf %20, %21 : vector<16x1xf32>
    %cst_8 = arith.constant 9.99999974E-6 : f32
    %23 = vector.broadcast %cst_8 : f32 to vector<16x1xf32>
    %24 = arith.addf %22, %23 : vector<16x1xf32>
    %25 = math.rsqrt %24 : vector<16x1xf32>
    %26 = vector.broadcast %25 : vector<16x1xf32> to vector<16x128xf32>
    %27 = arith.mulf %17, %26 : vector<16x128xf32>
    %28 = vector.broadcast %8 : vector<1x128xf32> to vector<16x128xf32>
    %29 = arith.mulf %27, %28 : vector<16x128xf32>
    %30 = vector.broadcast %9 : vector<1x128xf32> to vector<16x128xf32>
    %31 = arith.addf %29, %30 : vector<16x128xf32>
    %c0_9 = arith.constant 0 : index
    %c0_10 = arith.constant 0 : index
    %c0_11 = arith.constant 0 : index
    %32 = vector.load %arg5[%c0_9, %c0_10, %c0_11] : memref<2x16x128xf32, #tpu.memory_space<vmem>>, vector<1x16x128xf32>
    %33 = vector.shape_cast %32 : vector<1x16x128xf32> to vector<16x128xf32>
    %34 = arith.truncf %31 : vector<16x128xf32> to vector<16x128xbf16>
    %c0_12 = arith.constant 0 : index
    %c0_13 = arith.constant 0 : index
    %c0_14 = arith.constant 0 : index
    %35 = vector.load %arg4[%c0_12, %c0_13, %c0_14] : memref<2x256x384xbf16, #tpu.memory_space<vmem>>, vector<1x128x384xbf16>
    %36 = vector.shape_cast %35 : vector<1x128x384xbf16> to vector<128x384xbf16>
    %cst_15 = arith.constant dense<0.000000e+00> : vector<16x384xf32>
    %37 = tpu.matmul %34, %36, %cst_15 {dimension_numbers = #tpu.dot_dimension_numbers<[1], [0], [0], [1], [0, 0, 1, 1], [], []>} : vector<16x128xbf16>, vector<128x384xbf16>, vector<16x384xf32> -> vector<16x384xf32>
    %38 = vector.extract_strided_slice %37 {offsets = [0, 0], sizes = [16, 128], strides = [1, 1]} : vector<16x384xf32> to vector<16x128xf32>
    %39 = vector.extract_strided_slice %33 {offsets = [0, 0], sizes = [1, 128], strides = [1, 1]} : vector<16x128xf32> to vector<1x128xf32>
    %40 = vector.broadcast %39 : vector<1x128xf32> to vector<16x128xf32>
    %41 = arith.addf %38, %40 : vector<16x128xf32>
    %42 = vector.extract_strided_slice %37 {offsets = [0, 128], sizes = [16, 128], strides = [1, 1]} : vector<16x384xf32> to vector<16x128xf32>
    %43 = vector.extract_strided_slice %33 {offsets = [1, 0], sizes = [1, 128], strides = [1, 1]} : vector<16x128xf32> to vector<1x128xf32>
    %44 = vector.broadcast %43 : vector<1x128xf32> to vector<16x128xf32>
    %45 = arith.addf %42, %44 : vector<16x128xf32>
    %46 = vector.extract_strided_slice %37 {offsets = [0, 256], sizes = [16, 128], strides = [1, 1]} : vector<16x384xf32> to vector<16x128xf32>
    %47 = vector.extract_strided_slice %33 {offsets = [2, 0], sizes = [1, 128], strides = [1, 1]} : vector<16x128xf32> to vector<1x128xf32>
    %48 = vector.broadcast %47 : vector<1x128xf32> to vector<16x128xf32>
    %49 = arith.addf %46, %48 : vector<16x128xf32>
    %50 = arith.truncf %41 : vector<16x128xf32> to vector<16x128xbf16>
    %51 = arith.truncf %45 : vector<16x128xf32> to vector<16x128xbf16>
    %52 = arith.truncf %49 : vector<16x128xf32> to vector<16x128xbf16>
    %53 = vector.extract_strided_slice %50 {offsets = [0, 0], sizes = [16, 64], strides = [1, 1]} : vector<16x128xbf16> to vector<16x64xbf16>
    %54 = vector.extract_strided_slice %51 {offsets = [0, 0], sizes = [16, 64], strides = [1, 1]} : vector<16x128xbf16> to vector<16x64xbf16>
    %cst_16 = arith.constant dense<0.000000e+00> : vector<16x16xf32>
    %55 = tpu.matmul %53, %54, %cst_16 {dimension_numbers = #tpu.dot_dimension_numbers<[1], [1], [0], [0], [0, 0, 1, 0], [], []>} : vector<16x64xbf16>, vector<16x64xbf16>, vector<16x16xf32> -> vector<16x16xf32>
    %56 = vector.extract_strided_slice %50 {offsets = [0, 64], sizes = [16, 64], strides = [1, 1]} : vector<16x128xbf16> to vector<16x64xbf16>
    %57 = vector.extract_strided_slice %51 {offsets = [0, 64], sizes = [16, 64], strides = [1, 1]} : vector<16x128xbf16> to vector<16x64xbf16>
    %cst_17 = arith.constant dense<0.000000e+00> : vector<16x16xf32>
    %58 = tpu.matmul %56, %57, %cst_17 {dimension_numbers = #tpu.dot_dimension_numbers<[1], [1], [0], [0], [0, 0, 1, 0], [], []>} : vector<16x64xbf16>, vector<16x64xbf16>, vector<16x16xf32> -> vector<16x16xf32>
    %59 = tpu.concatenate %55, %58 in 0 : vector<16x16xf32>, vector<16x16xf32> -> vector<32x16xf32>
    %cst_18 = arith.constant 2.500000e-01 : f32
    %60 = vector.broadcast %cst_18 : f32 to vector<32x16xf32>
    %61 = arith.mulf %59, %60 : vector<32x16xf32>
    %62 = arith.addf %61, %5 : vector<32x16xf32>
    %cst_19 = arith.constant dense<0xFF800000> : vector<32xf32>
    %63 = vector.multi_reduction <maximumf>, %62, %cst_19 [1] : vector<32x16xf32> to vector<32xf32>
    %64 = vector.shape_cast %63 : vector<32xf32> to vector<32x1xf32>
    %65 = vector.broadcast %64 : vector<32x1xf32> to vector<32x16xf32>
    %66 = arith.subf %62, %65 : vector<32x16xf32>
    %67 = math.exp %66 : vector<32x16xf32>
    %cst_20 = arith.constant dense<0.000000e+00> : vector<32xf32>
    %68 = vector.multi_reduction <add>, %67, %cst_20 [1] : vector<32x16xf32> to vector<32xf32>
    %69 = vector.shape_cast %68 : vector<32xf32> to vector<32x1xf32>
    %70 = vector.broadcast %69 : vector<32x1xf32> to vector<32x16xf32>
    %71 = arith.divf %67, %70 : vector<32x16xf32>
    %72 = arith.truncf %71 : vector<32x16xf32> to vector<32x16xbf16>
    %73 = vector.extract_strided_slice %72 {offsets = [0, 0], sizes = [16, 16], strides = [1, 1]} : vector<32x16xbf16> to vector<16x16xbf16>
    %74 = vector.extract_strided_slice %52 {offsets = [0, 0], sizes = [16, 64], strides = [1, 1]} : vector<16x128xbf16> to vector<16x64xbf16>
    %cst_21 = arith.constant dense<0.000000e+00> : vector<16x64xf32>
    %75 = tpu.matmul %73, %74, %cst_21 {dimension_numbers = #tpu.dot_dimension_numbers<[1], [0], [0], [1], [0, 0, 1, 1], [], []>} : vector<16x16xbf16>, vector<16x64xbf16>, vector<16x64xf32> -> vector<16x64xf32>
    %76 = vector.extract_strided_slice %72 {offsets = [16, 0], sizes = [16, 16], strides = [1, 1]} : vector<32x16xbf16> to vector<16x16xbf16>
    %77 = vector.extract_strided_slice %52 {offsets = [0, 64], sizes = [16, 64], strides = [1, 1]} : vector<16x128xbf16> to vector<16x64xbf16>
    %cst_22 = arith.constant dense<0.000000e+00> : vector<16x64xf32>
    %78 = tpu.matmul %76, %77, %cst_22 {dimension_numbers = #tpu.dot_dimension_numbers<[1], [0], [0], [1], [0, 0, 1, 1], [], []>} : vector<16x16xbf16>, vector<16x64xbf16>, vector<16x64xf32> -> vector<16x64xf32>
    %79 = tpu.concatenate %75, %78 in 1 : vector<16x64xf32>, vector<16x64xf32> -> vector<16x128xf32>
    %80 = arith.truncf %79 : vector<16x128xf32> to vector<16x128xbf16>
    %c0_23 = arith.constant 0 : index
    %c128 = arith.constant 128 : index
    %c0_24 = arith.constant 0 : index
    %81 = vector.load %arg4[%c0_23, %c128, %c0_24] : memref<2x256x384xbf16, #tpu.memory_space<vmem>>, vector<1x128x128xbf16>
    %82 = vector.shape_cast %81 : vector<1x128x128xbf16> to vector<128x128xbf16>
    %cst_25 = arith.constant dense<0.000000e+00> : vector<16x128xf32>
    %83 = tpu.matmul %80, %82, %cst_25 {dimension_numbers = #tpu.dot_dimension_numbers<[1], [0], [0], [1], [0, 0, 1, 1], [], []>} : vector<16x128xbf16>, vector<128x128xbf16>, vector<16x128xf32> -> vector<16x128xf32>
    %84 = vector.extract_strided_slice %33 {offsets = [3, 0], sizes = [1, 128], strides = [1, 1]} : vector<16x128xf32> to vector<1x128xf32>
    %85 = vector.broadcast %84 : vector<1x128xf32> to vector<16x128xf32>
    %86 = arith.addf %83, %85 : vector<16x128xf32>
    %87 = arith.addf %86, %31 : vector<16x128xf32>
    %88 = vector.extract_strided_slice %33 {offsets = [4, 0], sizes = [1, 128], strides = [1, 1]} : vector<16x128xf32> to vector<1x128xf32>
    %89 = vector.extract_strided_slice %33 {offsets = [5, 0], sizes = [1, 128], strides = [1, 1]} : vector<16x128xf32> to vector<1x128xf32>
    %cst_26 = arith.constant dense<0.000000e+00> : vector<16xf32>
    %90 = vector.multi_reduction <add>, %87, %cst_26 [1] : vector<16x128xf32> to vector<16xf32>
    %91 = vector.shape_cast %90 : vector<16xf32> to vector<16x1xf32>
    %cst_27 = arith.constant 3.125000e-02 : f32
    %92 = vector.broadcast %cst_27 : f32 to vector<16x1xf32>
    %93 = arith.mulf %91, %92 : vector<16x1xf32>
    %94 = vector.broadcast %93 : vector<16x1xf32> to vector<16x128xf32>
    %95 = arith.subf %87, %94 : vector<16x128xf32>
    %96 = vector.broadcast %4 : vector<1x128xf32> to vector<16x128xf32>
    %97 = arith.mulf %95, %96 : vector<16x128xf32>
    %98 = arith.mulf %97, %97 : vector<16x128xf32>
    %cst_28 = arith.constant dense<0.000000e+00> : vector<16xf32>
    %99 = vector.multi_reduction <add>, %98, %cst_28 [1] : vector<16x128xf32> to vector<16xf32>
    %100 = vector.shape_cast %99 : vector<16xf32> to vector<16x1xf32>
    %cst_29 = arith.constant 3.125000e-02 : f32
    %101 = vector.broadcast %cst_29 : f32 to vector<16x1xf32>
    %102 = arith.mulf %100, %101 : vector<16x1xf32>
    %cst_30 = arith.constant 9.99999974E-6 : f32
    %103 = vector.broadcast %cst_30 : f32 to vector<16x1xf32>
    %104 = arith.addf %102, %103 : vector<16x1xf32>
    %105 = math.rsqrt %104 : vector<16x1xf32>
    %106 = vector.broadcast %105 : vector<16x1xf32> to vector<16x128xf32>
    %107 = arith.mulf %97, %106 : vector<16x128xf32>
    %108 = vector.broadcast %88 : vector<1x128xf32> to vector<16x128xf32>
    %109 = arith.mulf %107, %108 : vector<16x128xf32>
    %110 = vector.broadcast %89 : vector<1x128xf32> to vector<16x128xf32>
    %111 = arith.addf %109, %110 : vector<16x128xf32>
    %112 = arith.truncf %111 : vector<16x128xf32> to vector<16x128xbf16>
    %c0_31 = arith.constant 0 : index
    %c128_32 = arith.constant 128 : index
    %c128_33 = arith.constant 128 : index
    %113 = vector.load %arg4[%c0_31, %c128_32, %c128_33] : memref<2x256x384xbf16, #tpu.memory_space<vmem>>, vector<1x128x128xbf16>
    %114 = vector.shape_cast %113 : vector<1x128x128xbf16> to vector<128x128xbf16>
    %cst_34 = arith.constant dense<0.000000e+00> : vector<16x128xf32>
    %115 = tpu.matmul %112, %114, %cst_34 {dimension_numbers = #tpu.dot_dimension_numbers<[1], [0], [0], [1], [0, 0, 1, 1], [], []>} : vector<16x128xbf16>, vector<128x128xbf16>, vector<16x128xf32> -> vector<16x128xf32>
    %116 = vector.extract_strided_slice %33 {offsets = [6, 0], sizes = [1, 128], strides = [1, 1]} : vector<16x128xf32> to vector<1x128xf32>
    %117 = vector.broadcast %116 : vector<1x128xf32> to vector<16x128xf32>
    %118 = arith.addf %115, %117 : vector<16x128xf32>
    %cst_35 = arith.constant 5.000000e-01 : f32
    %119 = vector.broadcast %cst_35 : f32 to vector<16x128xf32>
    %120 = arith.mulf %119, %118 : vector<16x128xf32>
    %cst_36 = arith.constant 0.707106769 : f32
    %121 = vector.broadcast %cst_36 : f32 to vector<16x128xf32>
    %122 = arith.mulf %118, %121 : vector<16x128xf32>
    %cst_37 = arith.constant 0.000000e+00 : f32
    %123 = vector.broadcast %cst_37 : f32 to vector<16x128xf32>
    %124 = arith.cmpf olt, %122, %123 : vector<16x128xf32>
    %cst_38 = arith.constant -1.000000e+00 : f32
    %cst_39 = arith.constant 1.000000e+00 : f32
    %125 = vector.broadcast %cst_38 : f32 to vector<16x128xf32>
    %126 = vector.broadcast %cst_39 : f32 to vector<16x128xf32>
    %127 = arith.select %124, %125, %126 : vector<16x128xi1>, vector<16x128xf32>
    %128 = math.absf %122 : vector<16x128xf32>
    %cst_40 = arith.constant 0.327591091 : f32
    %129 = vector.broadcast %cst_40 : f32 to vector<16x128xf32>
    %130 = arith.mulf %129, %128 : vector<16x128xf32>
    %cst_41 = arith.constant 1.000000e+00 : f32
    %131 = vector.broadcast %cst_41 : f32 to vector<16x128xf32>
    %132 = arith.addf %131, %130 : vector<16x128xf32>
    %cst_42 = arith.constant 1.000000e+00 : f32
    %133 = vector.broadcast %cst_42 : f32 to vector<16x128xf32>
    %134 = arith.divf %133, %132 : vector<16x128xf32>
    %cst_43 = arith.constant 1.06140542 : f32
    %135 = vector.broadcast %cst_43 : f32 to vector<16x128xf32>
    %136 = arith.mulf %135, %134 : vector<16x128xf32>
    %cst_44 = arith.constant -1.45315206 : f32
    %137 = vector.broadcast %cst_44 : f32 to vector<16x128xf32>
    %138 = arith.addf %136, %137 : vector<16x128xf32>
    %139 = arith.mulf %138, %134 : vector<16x128xf32>
    %cst_45 = arith.constant 1.42141378 : f32
    %140 = vector.broadcast %cst_45 : f32 to vector<16x128xf32>
    %141 = arith.addf %139, %140 : vector<16x128xf32>
    %142 = arith.mulf %141, %134 : vector<16x128xf32>
    %cst_46 = arith.constant -0.284496725 : f32
    %143 = vector.broadcast %cst_46 : f32 to vector<16x128xf32>
    %144 = arith.addf %142, %143 : vector<16x128xf32>
    %145 = arith.mulf %144, %134 : vector<16x128xf32>
    %cst_47 = arith.constant 0.254829586 : f32
    %146 = vector.broadcast %cst_47 : f32 to vector<16x128xf32>
    %147 = arith.addf %145, %146 : vector<16x128xf32>
    %148 = arith.mulf %147, %134 : vector<16x128xf32>
    %cst_48 = arith.constant 0.000000e+00 : f32
    %149 = vector.broadcast %cst_48 : f32 to vector<16x128xf32>
    %150 = arith.subf %149, %128 : vector<16x128xf32>
    %151 = arith.mulf %150, %128 : vector<16x128xf32>
    %152 = math.exp %151 : vector<16x128xf32>
    %153 = arith.mulf %148, %152 : vector<16x128xf32>
    %cst_49 = arith.constant 1.000000e+00 : f32
    %154 = vector.broadcast %cst_49 : f32 to vector<16x128xf32>
    %155 = arith.subf %154, %153 : vector<16x128xf32>
    %156 = arith.mulf %127, %155 : vector<16x128xf32>
    %cst_50 = arith.constant 1.000000e+00 : f32
    %157 = vector.broadcast %cst_50 : f32 to vector<16x128xf32>
    %158 = arith.addf %157, %156 : vector<16x128xf32>
    %159 = arith.mulf %120, %158 : vector<16x128xf32>
    %160 = arith.truncf %159 : vector<16x128xf32> to vector<16x128xbf16>
    %c0_51 = arith.constant 0 : index
    %c128_52 = arith.constant 128 : index
    %c256 = arith.constant 256 : index
    %161 = vector.load %arg4[%c0_51, %c128_52, %c256] : memref<2x256x384xbf16, #tpu.memory_space<vmem>>, vector<1x128x128xbf16>
    %162 = vector.shape_cast %161 : vector<1x128x128xbf16> to vector<128x128xbf16>
    %cst_53 = arith.constant dense<0.000000e+00> : vector<16x128xf32>
    %163 = tpu.matmul %160, %162, %cst_53 {dimension_numbers = #tpu.dot_dimension_numbers<[1], [0], [0], [1], [0, 0, 1, 1], [], []>} : vector<16x128xbf16>, vector<128x128xbf16>, vector<16x128xf32> -> vector<16x128xf32>
    %164 = vector.extract_strided_slice %33 {offsets = [7, 0], sizes = [1, 128], strides = [1, 1]} : vector<16x128xf32> to vector<1x128xf32>
    %165 = vector.broadcast %164 : vector<1x128xf32> to vector<16x128xf32>
    %166 = arith.addf %163, %165 : vector<16x128xf32>
    %167 = arith.addf %166, %111 : vector<16x128xf32>
    %168 = vector.extract_strided_slice %33 {offsets = [8, 0], sizes = [1, 128], strides = [1, 1]} : vector<16x128xf32> to vector<1x128xf32>
    %169 = vector.extract_strided_slice %33 {offsets = [9, 0], sizes = [1, 128], strides = [1, 1]} : vector<16x128xf32> to vector<1x128xf32>
    %cst_54 = arith.constant dense<0.000000e+00> : vector<16xf32>
    %170 = vector.multi_reduction <add>, %167, %cst_54 [1] : vector<16x128xf32> to vector<16xf32>
    %171 = vector.shape_cast %170 : vector<16xf32> to vector<16x1xf32>
    %cst_55 = arith.constant 3.125000e-02 : f32
    %172 = vector.broadcast %cst_55 : f32 to vector<16x1xf32>
    %173 = arith.mulf %171, %172 : vector<16x1xf32>
    %174 = vector.broadcast %173 : vector<16x1xf32> to vector<16x128xf32>
    %175 = arith.subf %167, %174 : vector<16x128xf32>
    %176 = vector.broadcast %4 : vector<1x128xf32> to vector<16x128xf32>
    %177 = arith.mulf %175, %176 : vector<16x128xf32>
    %178 = arith.mulf %177, %177 : vector<16x128xf32>
    %cst_56 = arith.constant dense<0.000000e+00> : vector<16xf32>
    %179 = vector.multi_reduction <add>, %178, %cst_56 [1] : vector<16x128xf32> to vector<16xf32>
    %180 = vector.shape_cast %179 : vector<16xf32> to vector<16x1xf32>
    %cst_57 = arith.constant 3.125000e-02 : f32
    %181 = vector.broadcast %cst_57 : f32 to vector<16x1xf32>
    %182 = arith.mulf %180, %181 : vector<16x1xf32>
    %cst_58 = arith.constant 9.99999974E-6 : f32
    %183 = vector.broadcast %cst_58 : f32 to vector<16x1xf32>
    %184 = arith.addf %182, %183 : vector<16x1xf32>
    %185 = math.rsqrt %184 : vector<16x1xf32>
    %186 = vector.broadcast %185 : vector<16x1xf32> to vector<16x128xf32>
    %187 = arith.mulf %177, %186 : vector<16x128xf32>
    %188 = vector.broadcast %168 : vector<1x128xf32> to vector<16x128xf32>
    %189 = arith.mulf %187, %188 : vector<16x128xf32>
    %190 = vector.broadcast %169 : vector<1x128xf32> to vector<16x128xf32>
    %191 = arith.addf %189, %190 : vector<16x128xf32>
    %c1 = arith.constant 1 : index
    %c0_59 = arith.constant 0 : index
    %c0_60 = arith.constant 0 : index
    %192 = vector.load %arg5[%c1, %c0_59, %c0_60] : memref<2x16x128xf32, #tpu.memory_space<vmem>>, vector<1x16x128xf32>
    %193 = vector.shape_cast %192 : vector<1x16x128xf32> to vector<16x128xf32>
    %194 = arith.truncf %191 : vector<16x128xf32> to vector<16x128xbf16>
    %c1_61 = arith.constant 1 : index
    %c0_62 = arith.constant 0 : index
    %c0_63 = arith.constant 0 : index
    %195 = vector.load %arg4[%c1_61, %c0_62, %c0_63] : memref<2x256x384xbf16, #tpu.memory_space<vmem>>, vector<1x128x384xbf16>
    %196 = vector.shape_cast %195 : vector<1x128x384xbf16> to vector<128x384xbf16>
    %cst_64 = arith.constant dense<0.000000e+00> : vector<16x384xf32>
    %197 = tpu.matmul %194, %196, %cst_64 {dimension_numbers = #tpu.dot_dimension_numbers<[1], [0], [0], [1], [0, 0, 1, 1], [], []>} : vector<16x128xbf16>, vector<128x384xbf16>, vector<16x384xf32> -> vector<16x384xf32>
    %198 = vector.extract_strided_slice %197 {offsets = [0, 0], sizes = [16, 128], strides = [1, 1]} : vector<16x384xf32> to vector<16x128xf32>
    %199 = vector.extract_strided_slice %193 {offsets = [0, 0], sizes = [1, 128], strides = [1, 1]} : vector<16x128xf32> to vector<1x128xf32>
    %200 = vector.broadcast %199 : vector<1x128xf32> to vector<16x128xf32>
    %201 = arith.addf %198, %200 : vector<16x128xf32>
    %202 = vector.extract_strided_slice %197 {offsets = [0, 128], sizes = [16, 128], strides = [1, 1]} : vector<16x384xf32> to vector<16x128xf32>
    %203 = vector.extract_strided_slice %193 {offsets = [1, 0], sizes = [1, 128], strides = [1, 1]} : vector<16x128xf32> to vector<1x128xf32>
    %204 = vector.broadcast %203 : vector<1x128xf32> to vector<16x128xf32>
    %205 = arith.addf %202, %204 : vector<16x128xf32>
    %206 = vector.extract_strided_slice %197 {offsets = [0, 256], sizes = [16, 128], strides = [1, 1]} : vector<16x384xf32> to vector<16x128xf32>
    %207 = vector.extract_strided_slice %193 {offsets = [2, 0], sizes = [1, 128], strides = [1, 1]} : vector<16x128xf32> to vector<1x128xf32>
    %208 = vector.broadcast %207 : vector<1x128xf32> to vector<16x128xf32>
    %209 = arith.addf %206, %208 : vector<16x128xf32>
    %210 = arith.truncf %201 : vector<16x128xf32> to vector<16x128xbf16>
    %211 = arith.truncf %205 : vector<16x128xf32> to vector<16x128xbf16>
    %212 = arith.truncf %209 : vector<16x128xf32> to vector<16x128xbf16>
    %213 = vector.extract_strided_slice %210 {offsets = [0, 0], sizes = [16, 64], strides = [1, 1]} : vector<16x128xbf16> to vector<16x64xbf16>
    %214 = vector.extract_strided_slice %211 {offsets = [0, 0], sizes = [16, 64], strides = [1, 1]} : vector<16x128xbf16> to vector<16x64xbf16>
    %cst_65 = arith.constant dense<0.000000e+00> : vector<16x16xf32>
    %215 = tpu.matmul %213, %214, %cst_65 {dimension_numbers = #tpu.dot_dimension_numbers<[1], [1], [0], [0], [0, 0, 1, 0], [], []>} : vector<16x64xbf16>, vector<16x64xbf16>, vector<16x16xf32> -> vector<16x16xf32>
    %216 = vector.extract_strided_slice %210 {offsets = [0, 64], sizes = [16, 64], strides = [1, 1]} : vector<16x128xbf16> to vector<16x64xbf16>
    %217 = vector.extract_strided_slice %211 {offsets = [0, 64], sizes = [16, 64], strides = [1, 1]} : vector<16x128xbf16> to vector<16x64xbf16>
    %cst_66 = arith.constant dense<0.000000e+00> : vector<16x16xf32>
    %218 = tpu.matmul %216, %217, %cst_66 {dimension_numbers = #tpu.dot_dimension_numbers<[1], [1], [0], [0], [0, 0, 1, 0], [], []>} : vector<16x64xbf16>, vector<16x64xbf16>, vector<16x16xf32> -> vector<16x16xf32>
    %219 = tpu.concatenate %215, %218 in 0 : vector<16x16xf32>, vector<16x16xf32> -> vector<32x16xf32>
    %cst_67 = arith.constant 2.500000e-01 : f32
    %220 = vector.broadcast %cst_67 : f32 to vector<32x16xf32>
    %221 = arith.mulf %219, %220 : vector<32x16xf32>
    %222 = arith.addf %221, %5 : vector<32x16xf32>
    %cst_68 = arith.constant dense<0xFF800000> : vector<32xf32>
    %223 = vector.multi_reduction <maximumf>, %222, %cst_68 [1] : vector<32x16xf32> to vector<32xf32>
    %224 = vector.shape_cast %223 : vector<32xf32> to vector<32x1xf32>
    %225 = vector.broadcast %224 : vector<32x1xf32> to vector<32x16xf32>
    %226 = arith.subf %222, %225 : vector<32x16xf32>
    %227 = math.exp %226 : vector<32x16xf32>
    %cst_69 = arith.constant dense<0.000000e+00> : vector<32xf32>
    %228 = vector.multi_reduction <add>, %227, %cst_69 [1] : vector<32x16xf32> to vector<32xf32>
    %229 = vector.shape_cast %228 : vector<32xf32> to vector<32x1xf32>
    %230 = vector.broadcast %229 : vector<32x1xf32> to vector<32x16xf32>
    %231 = arith.divf %227, %230 : vector<32x16xf32>
    %232 = arith.truncf %231 : vector<32x16xf32> to vector<32x16xbf16>
    %233 = vector.extract_strided_slice %232 {offsets = [0, 0], sizes = [16, 16], strides = [1, 1]} : vector<32x16xbf16> to vector<16x16xbf16>
    %234 = vector.extract_strided_slice %212 {offsets = [0, 0], sizes = [16, 64], strides = [1, 1]} : vector<16x128xbf16> to vector<16x64xbf16>
    %cst_70 = arith.constant dense<0.000000e+00> : vector<16x64xf32>
    %235 = tpu.matmul %233, %234, %cst_70 {dimension_numbers = #tpu.dot_dimension_numbers<[1], [0], [0], [1], [0, 0, 1, 1], [], []>} : vector<16x16xbf16>, vector<16x64xbf16>, vector<16x64xf32> -> vector<16x64xf32>
    %236 = vector.extract_strided_slice %232 {offsets = [16, 0], sizes = [16, 16], strides = [1, 1]} : vector<32x16xbf16> to vector<16x16xbf16>
    %237 = vector.extract_strided_slice %212 {offsets = [0, 64], sizes = [16, 64], strides = [1, 1]} : vector<16x128xbf16> to vector<16x64xbf16>
    %cst_71 = arith.constant dense<0.000000e+00> : vector<16x64xf32>
    %238 = tpu.matmul %236, %237, %cst_71 {dimension_numbers = #tpu.dot_dimension_numbers<[1], [0], [0], [1], [0, 0, 1, 1], [], []>} : vector<16x16xbf16>, vector<16x64xbf16>, vector<16x64xf32> -> vector<16x64xf32>
    %239 = tpu.concatenate %235, %238 in 1 : vector<16x64xf32>, vector<16x64xf32> -> vector<16x128xf32>
    %240 = arith.truncf %239 : vector<16x128xf32> to vector<16x128xbf16>
    %c1_72 = arith.constant 1 : index
    %c128_73 = arith.constant 128 : index
    %c0_74 = arith.constant 0 : index
    %241 = vector.load %arg4[%c1_72, %c128_73, %c0_74] : memref<2x256x384xbf16, #tpu.memory_space<vmem>>, vector<1x128x128xbf16>
    %242 = vector.shape_cast %241 : vector<1x128x128xbf16> to vector<128x128xbf16>
    %cst_75 = arith.constant dense<0.000000e+00> : vector<16x128xf32>
    %243 = tpu.matmul %240, %242, %cst_75 {dimension_numbers = #tpu.dot_dimension_numbers<[1], [0], [0], [1], [0, 0, 1, 1], [], []>} : vector<16x128xbf16>, vector<128x128xbf16>, vector<16x128xf32> -> vector<16x128xf32>
    %244 = vector.extract_strided_slice %193 {offsets = [3, 0], sizes = [1, 128], strides = [1, 1]} : vector<16x128xf32> to vector<1x128xf32>
    %245 = vector.broadcast %244 : vector<1x128xf32> to vector<16x128xf32>
    %246 = arith.addf %243, %245 : vector<16x128xf32>
    %247 = arith.addf %246, %191 : vector<16x128xf32>
    %248 = vector.extract_strided_slice %193 {offsets = [4, 0], sizes = [1, 128], strides = [1, 1]} : vector<16x128xf32> to vector<1x128xf32>
    %249 = vector.extract_strided_slice %193 {offsets = [5, 0], sizes = [1, 128], strides = [1, 1]} : vector<16x128xf32> to vector<1x128xf32>
    %cst_76 = arith.constant dense<0.000000e+00> : vector<16xf32>
    %250 = vector.multi_reduction <add>, %247, %cst_76 [1] : vector<16x128xf32> to vector<16xf32>
    %251 = vector.shape_cast %250 : vector<16xf32> to vector<16x1xf32>
    %cst_77 = arith.constant 3.125000e-02 : f32
    %252 = vector.broadcast %cst_77 : f32 to vector<16x1xf32>
    %253 = arith.mulf %251, %252 : vector<16x1xf32>
    %254 = vector.broadcast %253 : vector<16x1xf32> to vector<16x128xf32>
    %255 = arith.subf %247, %254 : vector<16x128xf32>
    %256 = vector.broadcast %4 : vector<1x128xf32> to vector<16x128xf32>
    %257 = arith.mulf %255, %256 : vector<16x128xf32>
    %258 = arith.mulf %257, %257 : vector<16x128xf32>
    %cst_78 = arith.constant dense<0.000000e+00> : vector<16xf32>
    %259 = vector.multi_reduction <add>, %258, %cst_78 [1] : vector<16x128xf32> to vector<16xf32>
    %260 = vector.shape_cast %259 : vector<16xf32> to vector<16x1xf32>
    %cst_79 = arith.constant 3.125000e-02 : f32
    %261 = vector.broadcast %cst_79 : f32 to vector<16x1xf32>
    %262 = arith.mulf %260, %261 : vector<16x1xf32>
    %cst_80 = arith.constant 9.99999974E-6 : f32
    %263 = vector.broadcast %cst_80 : f32 to vector<16x1xf32>
    %264 = arith.addf %262, %263 : vector<16x1xf32>
    %265 = math.rsqrt %264 : vector<16x1xf32>
    %266 = vector.broadcast %265 : vector<16x1xf32> to vector<16x128xf32>
    %267 = arith.mulf %257, %266 : vector<16x128xf32>
    %268 = vector.broadcast %248 : vector<1x128xf32> to vector<16x128xf32>
    %269 = arith.mulf %267, %268 : vector<16x128xf32>
    %270 = vector.broadcast %249 : vector<1x128xf32> to vector<16x128xf32>
    %271 = arith.addf %269, %270 : vector<16x128xf32>
    %272 = arith.truncf %271 : vector<16x128xf32> to vector<16x128xbf16>
    %c1_81 = arith.constant 1 : index
    %c128_82 = arith.constant 128 : index
    %c128_83 = arith.constant 128 : index
    %273 = vector.load %arg4[%c1_81, %c128_82, %c128_83] : memref<2x256x384xbf16, #tpu.memory_space<vmem>>, vector<1x128x128xbf16>
    %274 = vector.shape_cast %273 : vector<1x128x128xbf16> to vector<128x128xbf16>
    %cst_84 = arith.constant dense<0.000000e+00> : vector<16x128xf32>
    %275 = tpu.matmul %272, %274, %cst_84 {dimension_numbers = #tpu.dot_dimension_numbers<[1], [0], [0], [1], [0, 0, 1, 1], [], []>} : vector<16x128xbf16>, vector<128x128xbf16>, vector<16x128xf32> -> vector<16x128xf32>
    %276 = vector.extract_strided_slice %193 {offsets = [6, 0], sizes = [1, 128], strides = [1, 1]} : vector<16x128xf32> to vector<1x128xf32>
    %277 = vector.broadcast %276 : vector<1x128xf32> to vector<16x128xf32>
    %278 = arith.addf %275, %277 : vector<16x128xf32>
    %cst_85 = arith.constant 5.000000e-01 : f32
    %279 = vector.broadcast %cst_85 : f32 to vector<16x128xf32>
    %280 = arith.mulf %279, %278 : vector<16x128xf32>
    %cst_86 = arith.constant 0.707106769 : f32
    %281 = vector.broadcast %cst_86 : f32 to vector<16x128xf32>
    %282 = arith.mulf %278, %281 : vector<16x128xf32>
    %cst_87 = arith.constant 0.000000e+00 : f32
    %283 = vector.broadcast %cst_87 : f32 to vector<16x128xf32>
    %284 = arith.cmpf olt, %282, %283 : vector<16x128xf32>
    %cst_88 = arith.constant -1.000000e+00 : f32
    %cst_89 = arith.constant 1.000000e+00 : f32
    %285 = vector.broadcast %cst_88 : f32 to vector<16x128xf32>
    %286 = vector.broadcast %cst_89 : f32 to vector<16x128xf32>
    %287 = arith.select %284, %285, %286 : vector<16x128xi1>, vector<16x128xf32>
    %288 = math.absf %282 : vector<16x128xf32>
    %cst_90 = arith.constant 0.327591091 : f32
    %289 = vector.broadcast %cst_90 : f32 to vector<16x128xf32>
    %290 = arith.mulf %289, %288 : vector<16x128xf32>
    %cst_91 = arith.constant 1.000000e+00 : f32
    %291 = vector.broadcast %cst_91 : f32 to vector<16x128xf32>
    %292 = arith.addf %291, %290 : vector<16x128xf32>
    %cst_92 = arith.constant 1.000000e+00 : f32
    %293 = vector.broadcast %cst_92 : f32 to vector<16x128xf32>
    %294 = arith.divf %293, %292 : vector<16x128xf32>
    %cst_93 = arith.constant 1.06140542 : f32
    %295 = vector.broadcast %cst_93 : f32 to vector<16x128xf32>
    %296 = arith.mulf %295, %294 : vector<16x128xf32>
    %cst_94 = arith.constant -1.45315206 : f32
    %297 = vector.broadcast %cst_94 : f32 to vector<16x128xf32>
    %298 = arith.addf %296, %297 : vector<16x128xf32>
    %299 = arith.mulf %298, %294 : vector<16x128xf32>
    %cst_95 = arith.constant 1.42141378 : f32
    %300 = vector.broadcast %cst_95 : f32 to vector<16x128xf32>
    %301 = arith.addf %299, %300 : vector<16x128xf32>
    %302 = arith.mulf %301, %294 : vector<16x128xf32>
    %cst_96 = arith.constant -0.284496725 : f32
    %303 = vector.broadcast %cst_96 : f32 to vector<16x128xf32>
    %304 = arith.addf %302, %303 : vector<16x128xf32>
    %305 = arith.mulf %304, %294 : vector<16x128xf32>
    %cst_97 = arith.constant 0.254829586 : f32
    %306 = vector.broadcast %cst_97 : f32 to vector<16x128xf32>
    %307 = arith.addf %305, %306 : vector<16x128xf32>
    %308 = arith.mulf %307, %294 : vector<16x128xf32>
    %cst_98 = arith.constant 0.000000e+00 : f32
    %309 = vector.broadcast %cst_98 : f32 to vector<16x128xf32>
    %310 = arith.subf %309, %288 : vector<16x128xf32>
    %311 = arith.mulf %310, %288 : vector<16x128xf32>
    %312 = math.exp %311 : vector<16x128xf32>
    %313 = arith.mulf %308, %312 : vector<16x128xf32>
    %cst_99 = arith.constant 1.000000e+00 : f32
    %314 = vector.broadcast %cst_99 : f32 to vector<16x128xf32>
    %315 = arith.subf %314, %313 : vector<16x128xf32>
    %316 = arith.mulf %287, %315 : vector<16x128xf32>
    %cst_100 = arith.constant 1.000000e+00 : f32
    %317 = vector.broadcast %cst_100 : f32 to vector<16x128xf32>
    %318 = arith.addf %317, %316 : vector<16x128xf32>
    %319 = arith.mulf %280, %318 : vector<16x128xf32>
    %320 = arith.truncf %319 : vector<16x128xf32> to vector<16x128xbf16>
    %c1_101 = arith.constant 1 : index
    %c128_102 = arith.constant 128 : index
    %c256_103 = arith.constant 256 : index
    %321 = vector.load %arg4[%c1_101, %c128_102, %c256_103] : memref<2x256x384xbf16, #tpu.memory_space<vmem>>, vector<1x128x128xbf16>
    %322 = vector.shape_cast %321 : vector<1x128x128xbf16> to vector<128x128xbf16>
    %cst_104 = arith.constant dense<0.000000e+00> : vector<16x128xf32>
    %323 = tpu.matmul %320, %322, %cst_104 {dimension_numbers = #tpu.dot_dimension_numbers<[1], [0], [0], [1], [0, 0, 1, 1], [], []>} : vector<16x128xbf16>, vector<128x128xbf16>, vector<16x128xf32> -> vector<16x128xf32>
    %324 = vector.extract_strided_slice %193 {offsets = [7, 0], sizes = [1, 128], strides = [1, 1]} : vector<16x128xf32> to vector<1x128xf32>
    %325 = vector.broadcast %324 : vector<1x128xf32> to vector<16x128xf32>
    %326 = arith.addf %323, %325 : vector<16x128xf32>
    %327 = arith.addf %326, %271 : vector<16x128xf32>
    %328 = vector.extract_strided_slice %193 {offsets = [8, 0], sizes = [1, 128], strides = [1, 1]} : vector<16x128xf32> to vector<1x128xf32>
    %329 = vector.extract_strided_slice %193 {offsets = [9, 0], sizes = [1, 128], strides = [1, 1]} : vector<16x128xf32> to vector<1x128xf32>
    %cst_105 = arith.constant dense<0.000000e+00> : vector<16xf32>
    %330 = vector.multi_reduction <add>, %327, %cst_105 [1] : vector<16x128xf32> to vector<16xf32>
    %331 = vector.shape_cast %330 : vector<16xf32> to vector<16x1xf32>
    %cst_106 = arith.constant 3.125000e-02 : f32
    %332 = vector.broadcast %cst_106 : f32 to vector<16x1xf32>
    %333 = arith.mulf %331, %332 : vector<16x1xf32>
    %334 = vector.broadcast %333 : vector<16x1xf32> to vector<16x128xf32>
    %335 = arith.subf %327, %334 : vector<16x128xf32>
    %336 = vector.broadcast %4 : vector<1x128xf32> to vector<16x128xf32>
    %337 = arith.mulf %335, %336 : vector<16x128xf32>
    %338 = arith.mulf %337, %337 : vector<16x128xf32>
    %cst_107 = arith.constant dense<0.000000e+00> : vector<16xf32>
    %339 = vector.multi_reduction <add>, %338, %cst_107 [1] : vector<16x128xf32> to vector<16xf32>
    %340 = vector.shape_cast %339 : vector<16xf32> to vector<16x1xf32>
    %cst_108 = arith.constant 3.125000e-02 : f32
    %341 = vector.broadcast %cst_108 : f32 to vector<16x1xf32>
    %342 = arith.mulf %340, %341 : vector<16x1xf32>
    %cst_109 = arith.constant 9.99999974E-6 : f32
    %343 = vector.broadcast %cst_109 : f32 to vector<16x1xf32>
    %344 = arith.addf %342, %343 : vector<16x1xf32>
    %345 = math.rsqrt %344 : vector<16x1xf32>
    %346 = vector.broadcast %345 : vector<16x1xf32> to vector<16x128xf32>
    %347 = arith.mulf %337, %346 : vector<16x128xf32>
    %348 = vector.broadcast %328 : vector<1x128xf32> to vector<16x128xf32>
    %349 = arith.mulf %347, %348 : vector<16x128xf32>
    %350 = vector.broadcast %329 : vector<1x128xf32> to vector<16x128xf32>
    %351 = arith.addf %349, %350 : vector<16x128xf32>
    %c0_110 = arith.constant 0 : index
    %c0_111 = arith.constant 0 : index
    %352 = vector.load %arg6[%c0_110, %c0_111] : memref<16x128xf32, #tpu.memory_space<vmem>>, vector<16x128xf32>
    tpu.vector_store %arg6[%c0_110, %c0_111], %351 {strides = array<i32>} : memref<16x128xf32, #tpu.memory_space<vmem>>, vector<16x128xf32>,
    %353 = vector.extract_strided_slice %351 {offsets = [0, 0], sizes = [1, 128], strides = [1, 1]} : vector<16x128xf32> to vector<1x128xf32>
    %354 = vector.extract_strided_slice %351 {offsets = [8, 0], sizes = [1, 128], strides = [1, 1]} : vector<16x128xf32> to vector<1x128xf32>
    %cst_112 = arith.constant 0.000000e+00 : f32
    %355 = vector.broadcast %cst_112 : f32 to vector<6x128xf32>
    %356 = tpu.concatenate %353, %354, %355 in 0 : vector<1x128xf32>, vector<1x128xf32>, vector<6x128xf32> -> vector<8x128xf32>
    %c0_113 = arith.constant 0 : index
    %c0_114 = arith.constant 0 : index
    %357 = vector.load %arg3[%c0_113, %c0_114] : memref<136x128xf32, #tpu.memory_space<vmem>>, vector<128x128xf32>
    %c128_115 = arith.constant 128 : index
    %c0_116 = arith.constant 0 : index
    %358 = vector.load %arg3[%c128_115, %c0_116] : memref<136x128xf32, #tpu.memory_space<vmem>>, vector<1x128xf32>
    %cst_117 = arith.constant dense<0.000000e+00> : vector<8x128xf32>
    %359 = tpu.matmul %356, %357, %cst_117 {dimension_numbers = #tpu.dot_dimension_numbers<[1], [0], [0], [1], [0, 0, 1, 1], [], []>} : vector<8x128xf32>, vector<128x128xf32>, vector<8x128xf32> -> vector<8x128xf32>
    %360 = vector.broadcast %358 : vector<1x128xf32> to vector<8x128xf32>
    %361 = arith.addf %359, %360 : vector<8x128xf32>
    %362 = math.tanh %361 : vector<8x128xf32>
    %c0_118 = arith.constant 0 : index
    %c0_119 = arith.constant 0 : index
    %363 = vector.load %arg7[%c0_118, %c0_119] : memref<8x128xf32, #tpu.memory_space<vmem>>, vector<8x128xf32>
    tpu.vector_store %arg7[%c0_118, %c0_119], %362 {strides = array<i32>} : memref<8x128xf32, #tpu.memory_space<vmem>>, vector<8x128xf32>,
    return
  }
}

</mosaic_0001>

<llo_original>
// kernel: roberta_forward.1
$region0: #{roberta_forward.1}
  #allocation0 [shape = 'u32[]', space=smem, size = 0x4, offset = 0x4, fixed_abs, tag = 'smem constant byte address 0x4 - core index']
  #allocation1 [shape = 'u32[144,128]{1,0:T(1,128)}', space=vmem, size = 0x12000, scoped, tag = 'internal scratch']
  %s0 = inlined_call_operand.vmem [shape: f32[16,128], index: 0, kind: input, shape index: {}]
  %s1 = inlined_call_operand.vmem [shape: f32[32,16], index: 1, kind: input, shape index: {}]
  %s2 = inlined_call_operand.vmem [shape: f32[2,128], index: 2, kind: input, shape index: {}]
  %s3 = inlined_call_operand.vmem [shape: f32[136,128], index: 3, kind: input, shape index: {}]
  %s4 = inlined_call_operand.vmem [shape: bf16[2,256,384], index: 4, kind: input, shape index: {}]
  %s5 = inlined_call_operand.hbm [shape: f32[2,16,128], index: 5, kind: input, shape index: {}]
  %s6 = inlined_call_operand.vmem [shape: f32[16,128], index: 6, kind: output, shape index: {0}]
  %s7 = inlined_call_operand.vmem [shape: f32[8,128], index: 7, kind: output, shape index: {1}]
  %8 = xla_tuple %s6, %s7
  %s9 = sld [smem:[#allocation0]]
  $region46: #{roberta_forward.1} parent=0
    _
  %s11 = ssub.s32 1, %s9
  %s12 = scalar_select 0, %s11, %s9
  $region1: #{roberta_forward.1} parent=0
    #allocation2 [shape = 'u8[16384]{0}', space=vmem, size = 0x4000, scoped, tag = 'input window, operand 5, single buffered']
    #allocation3 [shape = 's32[1]{0}', space=sflag, size = 0x4, scoped, tag = 'scoped memory for roberta_forward.1']
    %13 = vsyncpa [#allocation3], 0
    // Predicated region
    $region2: #{roberta_forward.1} parent=1 // pred_check
      _
    $region3: #{roberta_forward.1} parent=1 // pred_check_branch
      %15 = sbr.rel (0) target = $region5
    $region4: #{roberta_forward.1} parent=1 // pred_region
      _
    $region5: #{roberta_forward.1} parent=1 // pred_fallthru
      _
    // Predicated region
    $region6: #{roberta_forward.1} parent=1 // pred_check
      _
    $region7: #{roberta_forward.1} parent=1 // pred_check_branch
      %17 = sbr.rel (0) target = $region9
    $region8: #{roberta_forward.1} parent=1 // pred_region
      _
    $region9: #{roberta_forward.1} parent=1 // pred_fallthru
      _
    // Predicated region
    $region10: #{roberta_forward.1} parent=1 // pred_check
      _
    $region11: #{roberta_forward.1} parent=1 // pred_check_branch
      %19 = sbr.rel (0) target = $region13
    $region12: #{roberta_forward.1} parent=1 // pred_region
      _
    $region13: #{roberta_forward.1} parent=1 // pred_fallthru
      _
    // Predicated region
    $region14: #{roberta_forward.1} parent=1 // pred_check
      _
    $region15: #{roberta_forward.1} parent=1 // pred_check_branch
      %21 = sbr.rel (0) target = $region17
    $region16: #{roberta_forward.1} parent=1 // pred_region
      _
    $region17: #{roberta_forward.1} parent=1 // pred_fallthru
      _
    // Predicated region
    $region18: #{roberta_forward.1} parent=1 // pred_check
      _
    $region19: #{roberta_forward.1} parent=1 // pred_check_branch
      %23 = sbr.rel (0) target = $region21
    $region20: #{roberta_forward.1} parent=1 // pred_region
      _
    $region21: #{roberta_forward.1} parent=1 // pred_fallthru
      _
    // Predicated region
    $region22: #{roberta_forward.1} parent=1 // pred_check
      _
    $region23: #{roberta_forward.1} parent=1 // pred_check_branch
      %25 = sbr.rel (0) target = $region25
    $region24: #{roberta_forward.1} parent=1 // pred_region
      %s27 = ssub.s32 512, 512
      %28 = vsyncadd [#allocation3], %s27
      %s29 = sshll.u32 [#allocation2], 4
      %s30 = int_to_ptr.vmem [resolvable:$true] %s29
      %35 = dma.hbm_to_vmem [thread:$0]  %s5, 512, %s30, [#allocation3], 128, 128, 8
    $region25: #{roberta_forward.1} parent=1 // pred_fallthru
      _
    // Predicated region
    $region26: #{roberta_forward.1} parent=1 // pred_check
      _
    $region27: #{roberta_forward.1} parent=1 // pred_check_branch
      %37 = sbr.rel (0) target = $region29
    $region28: #{roberta_forward.1} parent=1 // pred_region
      %38 = dma.done [#allocation3], 512
    $region29: #{roberta_forward.1} parent=1 // pred_fallthru
      _
    %v40 = vlaneseq
    %v41 = vand.u32 %v40, 127
    %vm42 = vcmp.lt.s32.totalorder %v41, 32
    %v43 = vsel %vm42, 1, 0
    %v44 = vcvt.s32.f32 %v43
    %v45 = vld [vmem:[%s1] sm:$0xff]
    %v46 = vld [vmem:[%s1 + $0x8] sm:$0xff]
    %v47 = vld [vmem:[%s1 + $0x10] sm:$0xff]
    %v48 = vld [vmem:[%s1 + $0x18] sm:$0xff]
    %v49 = vld [vmem:[%s2] sm:$0x3]
    %v50 = vld [vmem:[%s0] sm:$0xff]
    %v51 = vld [vmem:[%s0 + $0x8] sm:$0xff]
    %52 = vadd.xlane.f32.xlu0 %v50
    %v53 = vpop.xlane.xlu0 %52
    %54 = vadd.xlane.f32.xlu0 %v51
    %v55 = vpop.xlane.xlu0 %54
    %v56 = vmul.f32 %v53, 0.03125
    %v57 = vmul.f32 %v55, 0.03125
    %v58 = vsub.f32 %v50, %v56
    %v59 = vsub.f32 %v51, %v57
    %v60 = vmul.f32 %v58, %v44
    %v61 = vmul.f32 %v59, %v44
    %v62 = vmul.f32 %v60, %v60
    %v63 = vmul.f32 %v61, %v61
    %64 = vadd.xlane.f32.xlu0 %v62
    %v65 = vpop.xlane.xlu0 %64
    %66 = vadd.xlane.f32.xlu0 %v63
    %v67 = vpop.xlane.xlu0 %66
    %v68 = vmul.f32 %v65, 0.03125
    %v69 = vmul.f32 %v67, 0.03125
    %v70 = vadd.f32 %v68, 1e-05
    %v71 = vadd.f32 %v69, 1e-05
    %v72 = vrsqrt.pop %v70
    %v73 = vrsqrt.pop %v71
    %v74 = vmul.f32 %v60, %v72
    %v75 = vmul.f32 %v61, %v73
    %v76 = vlaneseq
    %v77 = vshrl.u32 %v76, 7
    %v78 = vsub.s32 0, %v77
    %v79 = vrot.slane %v49, %v78
    %v80 = vmul.f32 %v74, %v79
    %v81 = vmul.f32 %v75, %v79
    %v82 = vlaneseq
    %v83 = vshrl.u32 %v82, 7
    %v84 = vsub.s32 1, %v83
    %v85 = vrot.slane %v49, %v84
    %v86 = vadd.f32 %v80, %v85
    %v87 = vadd.f32 %v81, %v85
    %v88 = vld [vmem:[#allocation2] sm:$0xff]
    %v89 = vld [vmem:[#allocation2 + $0x8] sm:$0xff]
    %v90 = vpack.c.bf16 %v87, %v86
    %v91 = vld [vmem:[%s4] sm:$0xff]
    %v92 = vld [vmem:[%s4 + $0x8] sm:$0xf]
    %v93 = vld [vmem:[%s4 + $0xc] sm:$0xff]
    %v94 = vld [vmem:[%s4 + $0x14] sm:$0xf]
    %v95 = vld [vmem:[%s4 + $0x18] sm:$0xff]
    %v96 = vld [vmem:[%s4 + $0x20] sm:$0xf]
    %v97 = vld [vmem:[%s4 + $0x24] sm:$0xff]
    %v98 = vld [vmem:[%s4 + $0x2c] sm:$0xf]
    %v99 = vld [vmem:[%s4 + $0x30] sm:$0xff]
    %v100 = vld [vmem:[%s4 + $0x38] sm:$0xf]
    %v101 = vld [vmem:[%s4 + $0x3c] sm:$0xff]
    %v102 = vld [vmem:[%s4 + $0x44] sm:$0xf]
    %v103 = vld [vmem:[%s4 + $0x48] sm:$0xff]
    %v104 = vld [vmem:[%s4 + $0x50] sm:$0xf]
    %v105 = vld [vmem:[%s4 + $0x54] sm:$0xff]
    %v106 = vld [vmem:[%s4 + $0x5c] sm:$0xf]
    %v107 = vld [vmem:[%s4 + $0x60] sm:$0xff]
    %v108 = vld [vmem:[%s4 + $0x68] sm:$0xf]
    %v109 = vld [vmem:[%s4 + $0x6c] sm:$0xff]
    %v110 = vld [vmem:[%s4 + $0x74] sm:$0xf]
    %v111 = vld [vmem:[%s4 + $0x78] sm:$0xff]
    %v112 = vld [vmem:[%s4 + $0x80] sm:$0xf]
    %v113 = vld [vmem:[%s4 + $0x84] sm:$0xff]
    %v114 = vld [vmem:[%s4 + $0x8c] sm:$0xf]
    %v115 = vld [vmem:[%s4 + $0x90] sm:$0xff]
    %v116 = vld [vmem:[%s4 + $0x98] sm:$0xf]
    %v117 = vld [vmem:[%s4 + $0x9c] sm:$0xff]
    %v118 = vld [vmem:[%s4 + $0xa4] sm:$0xf]
    %v119 = vld [vmem:[%s4 + $0xa8] sm:$0xff]
    %v120 = vld [vmem:[%s4 + $0xb0] sm:$0xf]
    %v121 = vld [vmem:[%s4 + $0xb4] sm:$0xff]
    %v122 = vld [vmem:[%s4 + $0xbc] sm:$0xf]
    %v155 = vunpack.c.l.b16 %v91
    %v156 = vunpack.c.h.b16 %v91
    %v157 = vunpack.c.l.b16 %v92
    %v158 = vunpack.c.l.b16 %v93
    %v159 = vunpack.c.h.b16 %v93
    %v160 = vunpack.c.l.b16 %v94
    %v161 = vunpack.c.l.b16 %v95
    %v162 = vunpack.c.h.b16 %v95
    %v163 = vunpack.c.l.b16 %v96
    %v164 = vunpack.c.l.b16 %v97
    %v165 = vunpack.c.h.b16 %v97
    %v166 = vunpack.c.l.b16 %v98
    %v167 = vunpack.c.l.b16 %v99
    %v168 = vunpack.c.h.b16 %v99
    %v169 = vunpack.c.l.b16 %v100
    %v170 = vunpack.c.l.b16 %v101
    %v171 = vunpack.c.h.b16 %v101
    %v172 = vunpack.c.l.b16 %v102
    %v173 = vunpack.c.l.b16 %v103
    %v174 = vunpack.c.h.b16 %v103
    %v175 = vunpack.c.l.b16 %v104
    %v176 = vunpack.c.l.b16 %v105
    %v177 = vunpack.c.h.b16 %v105
    %v178 = vunpack.c.l.b16 %v106
    %v179 = vunpack.c.l.b16 %v107
    %v180 = vunpack.c.h.b16 %v107
    %v181 = vunpack.c.l.b16 %v108
    %v182 = vunpack.c.l.b16 %v109
    %v183 = vunpack.c.h.b16 %v109
    %v184 = vunpack.c.l.b16 %v110
    %v185 = vunpack.c.l.b16 %v111
    %v186 = vunpack.c.h.b16 %v111
    %v187 = vunpack.c.l.b16 %v112
    %v188 = vunpack.c.l.b16 %v113
    %v189 = vunpack.c.h.b16 %v113
    %v190 = vunpack.c.l.b16 %v114
    %v191 = vunpack.c.l.b16 %v115
    %v192 = vunpack.c.h.b16 %v115
    %v193 = vunpack.c.l.b16 %v116
    %v194 = vunpack.c.l.b16 %v117
    %v195 = vunpack.c.h.b16 %v117
    %v196 = vunpack.c.l.b16 %v118
    %v197 = vunpack.c.l.b16 %v119
    %v198 = vunpack.c.h.b16 %v119
    %v199 = vunpack.c.l.b16 %v120
    %v200 = vunpack.c.l.b16 %v121
    %v201 = vunpack.c.h.b16 %v121
    %v202 = vunpack.c.l.b16 %v122
    %v203 = vpack.c.b16 %v158, %v155
    %v204 = vpack.c.b16 %v159, %v156
    %v205 = vpack.c.b16 %v160, %v157
    %v206 = vpack.c.b16 %v164, %v161
    %v207 = vpack.c.b16 %v165, %v162
    %v208 = vpack.c.b16 %v166, %v163
    %v209 = vpack.c.b16 %v170, %v167
    %v210 = vpack.c.b16 %v171, %v168
    %v211 = vpack.c.b16 %v172, %v169
    %v212 = vpack.c.b16 %v176, %v173
    %v213 = vpack.c.b16 %v177, %v174
    %v214 = vpack.c.b16 %v178, %v175
    %v215 = vpack.c.b16 %v182, %v179
    %v216 = vpack.c.b16 %v183, %v180
    %v217 = vpack.c.b16 %v184, %v181
    %v218 = vpack.c.b16 %v188, %v185
    %v219 = vpack.c.b16 %v189, %v186
    %v220 = vpack.c.b16 %v190, %v187
    %v221 = vpack.c.b16 %v194, %v191
    %v222 = vpack.c.b16 %v195, %v192
    %v223 = vpack.c.b16 %v196, %v193
    %v224 = vpack.c.b16 %v200, %v197
    %v225 = vpack.c.b16 %v201, %v198
    %v226 = vpack.c.b16 %v202, %v199
    %251 = vmatprep.subr.bf16.mxu0 %v225
    %252 = vmatpush1.bf16.msra.mxu0 %v224
    %253 = vmatprep.subr.bf16.mxu0 %v222
    %254 = vmatpush1.bf16.msra.mxu0 %v221
    %255 = vmatprep.subr.bf16.mxu0 %v219
    %256 = vmatpush1.bf16.msra.mxu0 %v218
    %257 = vmatprep.subr.bf16.mxu0 %v216
    %258 = vmatpush1.bf16.msra.mxu0 %v215
    %259 = vmatprep.subr.bf16.mxu0 %v213
    %260 = vmatpush1.bf16.msra.mxu0 %v212
    %261 = vmatprep.subr.bf16.mxu0 %v210
    %262 = vmatpush1.bf16.msra.mxu0 %v209
    %263 = vmatprep.subr.bf16.mxu0 %v207
    %264 = vmatpush1.bf16.msra.mxu0 %v206
    %265 = vmatprep.subr.bf16.mxu0 %v204
    %266 = vmatpush1.bf16.msra.mxu0 %v203
    %267 = vmatprep.subr.bf16.mxu0 0
    %268 = vmatpush2.bf16.msra.mxu0 0
    %269 = vmatprep.subr.bf16.mxu0 0
    %270 = vmatpush2.bf16.msra.mxu0 0
    %271 = vmatprep.subr.bf16.mxu0 0
    %272 = vmatpush2.bf16.msra.mxu0 0
    %273 = vmatprep.subr.bf16.mxu0 0
    %274 = vmatpush2.bf16.msra.mxu0 0
    %275 = vmatprep.subr.bf16.mxu0 0
    %276 = vmatpush2.bf16.msra.mxu0 0
    %277 = vmatprep.subr.bf16.mxu0 0
    %278 = vmatpush2.bf16.msra.mxu0 0
    %279 = vmatprep.subr.bf16.mxu0 0
    %280 = vmatpush2.bf16.msra.mxu0 0
    %281 = vmatprep.subr.bf16.mxu0 0
    %282 = vmatpush2.bf16.msra.mxu0 0
    %283 = vmatprep.mubr.bf16.mxu0 0
    %284 = vmatmul.mubr.bf16.gmra.mxu0 %v90
    %v285 = vpop.f32.mrf.mxu0
    %v286 = vadd.f32 0.0, %v285
    %v287 = vpop.f32.mrf.mxu0
    %v288 = vadd.f32 0.0, %v287
    %v289 = vpop.f32.mrf.mxu0
    %v290 = vadd.f32 0.0, %v289
    %v291 = vpop.f32.mrf.mxu0
    %v292 = vadd.f32 0.0, %v291
    %293 = vdwg.mxu0
    %294 = vmatprep.subr.bf16.mxu0 0
    %295 = vmatpush1.bf16.msra.mxu0 %v226
    %296 = vmatprep.subr.bf16.mxu0 0
    %297 = vmatpush1.bf16.msra.mxu0 %v223
    %298 = vmatprep.subr.bf16.mxu0 0
    %299 = vmatpush1.bf16.msra.mxu0 %v220
    %300 = vmatprep.subr.bf16.mxu0 0
    %301 = vmatpush1.bf16.msra.mxu0 %v217
    %302 = vmatprep.subr.bf16.mxu0 0
    %303 = vmatpush1.bf16.msra.mxu0 %v214
    %304 = vmatprep.subr.bf16.mxu0 0
    %305 = vmatpush1.bf16.msra.mxu0 %v211
    %306 = vmatprep.subr.bf16.mxu0 0
    %307 = vmatpush1.bf16.msra.mxu0 %v208
    %308 = vmatprep.subr.bf16.mxu0 0
    %309 = vmatpush1.bf16.msra.mxu0 %v205
    %310 = vmatprep.subr.bf16.mxu0 0
    %311 = vmatpush2.bf16.msra.mxu0 0
    %312 = vmatprep.subr.bf16.mxu0 0
    %313 = vmatpush2.bf16.msra.mxu0 0
    %314 = vmatprep.subr.bf16.mxu0 0
    %315 = vmatpush2.bf16.msra.mxu0 0
    %316 = vmatprep.subr.bf16.mxu0 0
    %317 = vmatpush2.bf16.msra.mxu0 0
    %318 = vmatprep.subr.bf16.mxu0 0
    %319 = vmatpush2.bf16.msra.mxu0 0
    %320 = vmatprep.subr.bf16.mxu0 0
    %321 = vmatpush2.bf16.msra.mxu0 0
    %322 = vmatprep.subr.bf16.mxu0 0
    %323 = vmatpush2.bf16.msra.mxu0 0
    %324 = vmatprep.subr.bf16.mxu0 0
    %325 = vmatpush2.bf16.msra.mxu0 0
    %326 = vmatprep.mubr.bf16.mxu0 0
    %327 = vmatmul.mubr.bf16.gmra.mxu0 %v90
    %v328 = vpop.f32.mrf.mxu0
    %v329 = vadd.f32 0.0, %v328
    %v330 = vpop.f32.mrf.mxu0
    %v331 = vpop.f32.mrf.mxu0
    %v332 = vadd.f32 0.0, %v331
    %v333 = vpop.f32.mrf.mxu0
    %334 = vdwg.mxu0
    %v335 = vlaneseq
    %v336 = vshrl.u32 %v335, 7
    %v337 = vsub.s32 0, %v336
    %v338 = vrot.slane %v88, %v337
    %v339 = vadd.f32 %v286, %v338
    %v340 = vadd.f32 %v290, %v338
    %v341 = vlaneseq
    %v342 = vshrl.u32 %v341, 7
    %v343 = vsub.s32 1, %v342
    %v344 = vrot.slane %v88, %v343
    %v345 = vadd.f32 %v288, %v344
    %v346 = vadd.f32 %v292, %v344
    %v347 = vlaneseq
    %v348 = vshrl.u32 %v347, 7
    %v349 = vsub.s32 2, %v348
    %v350 = vrot.slane %v88, %v349
    %v351 = vadd.f32 %v329, %v350
    %v352 = vadd.f32 %v332, %v350
    %v353 = vpack.c.bf16 %v340, %v339
    %v354 = vpack.c.bf16 %v346, %v345
    %v355 = vpack.c.bf16 %v352, %v351
    %vm356 = vcmask 523264
    %v358 = vsel %vm356, %v353, 0
    %v361 = vsel %vm356, %v354, 0
    %363 = vmatprep.subr.bf16.mxu0 0
    %364 = vmatpush1.bf16.xpose.msra.mxu0 0
    %365 = vmatprep.subr.bf16.mxu0 0
    %366 = vmatpush1.bf16.xpose.msra.mxu0 0
    %367 = vmatprep.subr.bf16.mxu0 0
    %368 = vmatpush1.bf16.xpose.msra.mxu0 0
    %369 = vmatprep.subr.bf16.mxu0 0
    %370 = vmatpush1.bf16.xpose.msra.mxu0 0
    %371 = vmatprep.subr.bf16.mxu0 0
    %372 = vmatpush1.bf16.xpose.msra.mxu0 0
    %373 = vmatprep.subr.bf16.mxu0 0
    %374 = vmatpush1.bf16.xpose.msra.mxu0 0
    %375 = vmatprep.subr.bf16.mxu0 0
    %376 = vmatpush1.bf16.xpose.msra.mxu0 0
    %377 = vmatprep.subr.bf16.mxu0 0
    %378 = vmatpush1.bf16.xpose.msra.mxu0 %v361
    %379 = vmatprep.subr.bf16.mxu0 0
    %380 = vmatpush2.bf16.xpose.msra.mxu0 0
    %381 = vmatprep.subr.bf16.mxu0 0
    %382 = vmatpush2.bf16.xpose.msra.mxu0 0
    %383 = vmatprep.subr.bf16.mxu0 0
    %384 = vmatpush2.bf16.xpose.msra.mxu0 0
    %385 = vmatprep.subr.bf16.mxu0 0
    %386 = vmatpush2.bf16.xpose.msra.mxu0 0
    %387 = vmatprep.subr.bf16.mxu0 0
    %388 = vmatpush2.bf16.xpose.msra.mxu0 0
    %389 = vmatprep.subr.bf16.mxu0 0
    %390 = vmatpush2.bf16.xpose.msra.mxu0 0
    %391 = vmatprep.subr.bf16.mxu0 0
    %392 = vmatpush2.bf16.xpose.msra.mxu0 0
    %393 = vmatprep.subr.bf16.mxu0 0
    %394 = vmatpush2.bf16.xpose.msra.mxu0 0
    %395 = vmatprep.mubr.bf16.mxu0 0
    %396 = vmatmul.mubr.bf16.gmra.mxu0 %v358
    %v397 = vpop.f32.mrf.mxu0
    %v398 = vadd.f32 0.0, %v397
    %v399 = vpop.f32.mrf.mxu0
    %v400 = vpop.f32.mrf.mxu0
    %v401 = vadd.f32 0.0, %v400
    %v402 = vpop.f32.mrf.mxu0
    %403 = vdwg.mxu0
    %405 = vrot.lane.b32.xlu0 %v353, 64
    %v406 = vpop.permute.xlu0 %405
    %408 = vrot.lane.b32.xlu0 %v354, 64
    %v409 = vpop.permute.xlu0 %408
    %v411 = vsel %vm356, %v406, 0
    %v414 = vsel %vm356, %v409, 0
    %416 = vmatprep.subr.bf16.mxu0 0
    %417 = vmatpush1.bf16.xpose.msra.mxu0 0
    %418 = vmatprep.subr.bf16.mxu0 0
    %419 = vmatpush1.bf16.xpose.msra.mxu0 0
    %420 = vmatprep.subr.bf16.mxu0 0
    %421 = vmatpush1.bf16.xpose.msra.mxu0 0
    %422 = vmatprep.subr.bf16.mxu0 0
    %423 = vmatpush1.bf16.xpose.msra.mxu0 0
    %424 = vmatprep.subr.bf16.mxu0 0
    %425 = vmatpush1.bf16.xpose.msra.mxu0 0
    %426 = vmatprep.subr.bf16.mxu0 0
    %427 = vmatpush1.bf16.xpose.msra.mxu0 0
    %428 = vmatprep.subr.bf16.mxu0 0
    %429 = vmatpush1.bf16.xpose.msra.mxu0 0
    %430 = vmatprep.subr.bf16.mxu0 0
    %431 = vmatpush1.bf16.xpose.msra.mxu0 %v414
    %432 = vmatprep.subr.bf16.mxu0 0
    %433 = vmatpush2.bf16.xpose.msra.mxu0 0
    %434 = vmatprep.subr.bf16.mxu0 0
    %435 = vmatpush2.bf16.xpose.msra.mxu0 0
    %436 = vmatprep.subr.bf16.mxu0 0
    %437 = vmatpush2.bf16.xpose.msra.mxu0 0
    %438 = vmatprep.subr.bf16.mxu0 0
    %439 = vmatpush2.bf16.xpose.msra.mxu0 0
    %440 = vmatprep.subr.bf16.mxu0 0
    %441 = vmatpush2.bf16.xpose.msra.mxu0 0
    %442 = vmatprep.subr.bf16.mxu0 0
    %443 = vmatpush2.bf16.xpose.msra.mxu0 0
    %444 = vmatprep.subr.bf16.mxu0 0
    %445 = vmatpush2.bf16.xpose.msra.mxu0 0
    %446 = vmatprep.subr.bf16.mxu0 0
    %447 = vmatpush2.bf16.xpose.msra.mxu0 0
    %448 = vmatprep.mubr.bf16.mxu0 0
    %449 = vmatmul.mubr.bf16.gmra.mxu0 %v411
    %v450 = vpop.f32.mrf.mxu0
    %v451 = vadd.f32 0.0, %v450
    %v452 = vpop.f32.mrf.mxu0
    %v453 = vpop.f32.mrf.mxu0
    %v454 = vadd.f32 0.0, %v453
    %v455 = vpop.f32.mrf.mxu0
    %456 = vdwg.mxu0
    %v457 = vmul.f32 %v398, 0.25
    %v458 = vmul.f32 %v401, 0.25
    %v459 = vmul.f32 %v451, 0.25
    %v460 = vmul.f32 %v454, 0.25
    %v461 = vadd.f32 %v457, %v45
    %v462 = vadd.f32 %v458, %v46
    %v463 = vadd.f32 %v459, %v47
    %v464 = vadd.f32 %v460, %v48
    %vm465 = vcmask 130048
    %v466 = vsel %vm465, %v461, -inf
    %467 = vmax.xlane.f32.xlu0 %v466
    %v468 = vpop.xlane.xlu0 %467
    %v469 = vsel %vm465, %v462, -inf
    %470 = vmax.xlane.f32.xlu0 %v469
    %v471 = vpop.xlane.xlu0 %470
    %v472 = vsel %vm465, %v463, -inf
    %473 = vmax.xlane.f32.xlu0 %v472
    %v474 = vpop.xlane.xlu0 %473
    %v475 = vsel %vm465, %v464, -inf
    %476 = vmax.xlane.f32.xlu0 %v475
    %v477 = vpop.xlane.xlu0 %476
    %v478 = vsub.f32 %v461, %v468
    %v479 = vsub.f32 %v462, %v471
    %v480 = vsub.f32 %v463, %v474
    %v481 = vsub.f32 %v464, %v477
    %v482 = vmul.f32 %v478, 1.442695
    %v483 = vpow.pop %v482
    %v484 = vmul.f32 %v479, 1.442695
    %v485 = vpow.pop %v484
    %v486 = vmul.f32 %v480, 1.442695
    %v487 = vpow.pop %v486
    %v488 = vmul.f32 %v481, 1.442695
    %v489 = vpow.pop %v488
    %v490 = vsel %vm465, %v483, 0.0
    %491 = vadd.xlane.f32.xlu0 %v490
    %v492 = vpop.xlane.xlu0 %491
    %v493 = vsel %vm465, %v485, 0.0
    %494 = vadd.xlane.f32.xlu0 %v493
    %v495 = vpop.xlane.xlu0 %494
    %v496 = vsel %vm465, %v487, 0.0
    %497 = vadd.xlane.f32.xlu0 %v496
    %v498 = vpop.xlane.xlu0 %497
    %v499 = vsel %vm465, %v489, 0.0
    %500 = vadd.xlane.f32.xlu0 %v499
    %v501 = vpop.xlane.xlu0 %500
    %v502 = vrcp.pop %v492
    %v503 = vmul.f32 %v483, %v502
    %v504 = vrcp.pop %v495
    %v505 = vmul.f32 %v485, %v504
    %v506 = vrcp.pop %v498
    %v507 = vmul.f32 %v487, %v506
    %v508 = vrcp.pop %v501
    %v509 = vmul.f32 %v489, %v508
    %v510 = vpack.c.bf16 %v505, %v503
    %v511 = vpack.c.bf16 %v509, %v507
    %v513 = vsel %vm465, %v510, 0
    %515 = vmatprep.subr.bf16.mxu0 0
    %516 = vmatpush1.bf16.msra.mxu0 0
    %517 = vmatprep.subr.bf16.mxu0 0
    %518 = vmatpush1.bf16.msra.mxu0 0
    %519 = vmatprep.subr.bf16.mxu0 0
    %520 = vmatpush1.bf16.msra.mxu0 0
    %521 = vmatprep.subr.bf16.mxu0 0
    %522 = vmatpush1.bf16.msra.mxu0 0
    %523 = vmatprep.subr.bf16.mxu0 0
    %524 = vmatpush1.bf16.msra.mxu0 0
    %525 = vmatprep.subr.bf16.mxu0 0
    %526 = vmatpush1.bf16.msra.mxu0 0
    %527 = vmatprep.subr.bf16.mxu0 0
    %528 = vmatpush1.bf16.msra.mxu0 0
    %529 = vmatprep.subr.bf16.mxu0 0
    %530 = vmatpush1.bf16.msra.mxu0 %v355
    %531 = vmatprep.subr.bf16.mxu0 0
    %532 = vmatpush2.bf16.msra.mxu0 0
    %533 = vmatprep.subr.bf16.mxu0 0
    %534 = vmatpush2.bf16.msra.mxu0 0
    %535 = vmatprep.subr.bf16.mxu0 0
    %536 = vmatpush2.bf16.msra.mxu0 0
    %537 = vmatprep.subr.bf16.mxu0 0
    %538 = vmatpush2.bf16.msra.mxu0 0
    %539 = vmatprep.subr.bf16.mxu0 0
    %540 = vmatpush2.bf16.msra.mxu0 0
    %541 = vmatprep.subr.bf16.mxu0 0
    %542 = vmatpush2.bf16.msra.mxu0 0
    %543 = vmatprep.subr.bf16.mxu0 0
    %544 = vmatpush2.bf16.msra.mxu0 0
    %545 = vmatprep.subr.bf16.mxu0 0
    %546 = vmatpush2.bf16.msra.mxu0 0
    %547 = vmatprep.mubr.bf16.mxu0 0
    %548 = vmatmul.mubr.bf16.gmra.mxu0 %v513
    %v549 = vpop.f32.mrf.mxu0
    %v550 = vadd.f32 0.0, %v549
    %v551 = vpop.f32.mrf.mxu0
    %v552 = vpop.f32.mrf.mxu0
    %v553 = vadd.f32 0.0, %v552
    %v554 = vpop.f32.mrf.mxu0
    %555 = vdwg.mxu0
    %557 = vrot.lane.b32.xlu0 %v355, 64
    %v558 = vpop.permute.xlu0 %557
    %v561 = vsel %vm465, %v511, 0
    %563 = vmatprep.subr.bf16.mxu0 0
    %564 = vmatpush1.bf16.msra.mxu0 0
    %565 = vmatprep.subr.bf16.mxu0 0
    %566 = vmatpush1.bf16.msra.mxu0 0
    %567 = vmatprep.subr.bf16.mxu0 0
    %568 = vmatpush1.bf16.msra.mxu0 0
    %569 = vmatprep.subr.bf16.mxu0 0
    %570 = vmatpush1.bf16.msra.mxu0 0
    %571 = vmatprep.subr.bf16.mxu0 0
    %572 = vmatpush1.bf16.msra.mxu0 0
    %573 = vmatprep.subr.bf16.mxu0 0
    %574 = vmatpush1.bf16.msra.mxu0 0
    %575 = vmatprep.subr.bf16.mxu0 0
    %576 = vmatpush1.bf16.msra.mxu0 0
    %577 = vmatprep.subr.bf16.mxu0 0
    %578 = vmatpush1.bf16.msra.mxu0 %v558
    %579 = vmatprep.subr.bf16.mxu0 0
    %580 = vmatpush2.bf16.msra.mxu0 0
    %581 = vmatprep.subr.bf16.mxu0 0
    %582 = vmatpush2.bf16.msra.mxu0 0
    %583 = vmatprep.subr.bf16.mxu0 0
    %584 = vmatpush2.bf16.msra.mxu0 0
    %585 = vmatprep.subr.bf16.mxu0 0
    %586 = vmatpush2.bf16.msra.mxu0 0
    %587 = vmatprep.subr.bf16.mxu0 0
    %588 = vmatpush2.bf16.msra.mxu0 0
    %589 = vmatprep.subr.bf16.mxu0 0
    %590 = vmatpush2.bf16.msra.mxu0 0
    %591 = vmatprep.subr.bf16.mxu0 0
    %592 = vmatpush2.bf16.msra.mxu0 0
    %593 = vmatprep.subr.bf16.mxu0 0
    %594 = vmatpush2.bf16.msra.mxu0 0
    %595 = vmatprep.mubr.bf16.mxu0 0
    %596 = vmatmul.mubr.bf16.gmra.mxu0 %v561
    %v597 = vpop.f32.mrf.mxu0
    %v598 = vadd.f32 0.0, %v597
    %v599 = vpop.f32.mrf.mxu0
    %v600 = vpop.f32.mrf.mxu0
    %v601 = vadd.f32 0.0, %v600
    %v602 = vpop.f32.mrf.mxu0
    %603 = vdwg.mxu0
    %606 = vrot.lane.b32.xlu0 %v598, 64
    %v607 = vpop.permute.xlu0 %606
    %608 = vrot.lane.b32.xlu0 %v601, 64
    %v609 = vpop.permute.xlu0 %608
    %v612 = vsel %vm356, %v550, %v607
    %v613 = vsel %vm356, %v553, %v609
    %v614 = vpack.c.bf16 %v613, %v612
    %v615 = vld [vmem:[%s4 + $0xc0] sm:$0xf]
    %v616 = vld [vmem:[%s4 + $0xcc] sm:$0xf]
    %v617 = vld [vmem:[%s4 + $0xd8] sm:$0xf]
    %v618 = vld [vmem:[%s4 + $0xe4] sm:$0xf]
    %v619 = vld [vmem:[%s4 + $0xf0] sm:$0xf]
    %v620 = vld [vmem:[%s4 + $0xfc] sm:$0xf]
    %v621 = vld [vmem:[%s4 + $0x108] sm:$0xf]
    %v622 = vld [vmem:[%s4 + $0x114] sm:$0xf]
    %v623 = vld [vmem:[%s4 + $0x120] sm:$0xf]
    %v624 = vld [vmem:[%s4 + $0x12c] sm:$0xf]
    %v625 = vld [vmem:[%s4 + $0x138] sm:$0xf]
    %v626 = vld [vmem:[%s4 + $0x144] sm:$0xf]
    %v627 = vld [vmem:[%s4 + $0x150] sm:$0xf]
    %v628 = vld [vmem:[%s4 + $0x15c] sm:$0xf]
    %v629 = vld [vmem:[%s4 + $0x168] sm:$0xf]
    %v630 = vld [vmem:[%s4 + $0x174] sm:$0xf]
    %v631 = vlaneseq
    %v632 = vshrl.u32 %v631, 7
    %v633 = vsub.s32 3, %v632
    %v634 = vrot.slane %v88, %v633
    %v651 = vunpack.c.l.b16 %v615
    %v652 = vunpack.c.l.b16 %v616
    %v653 = vunpack.c.l.b16 %v617
    %v654 = vunpack.c.l.b16 %v618
    %v655 = vunpack.c.l.b16 %v619
    %v656 = vunpack.c.l.b16 %v620
    %v657 = vunpack.c.l.b16 %v621
    %v658 = vunpack.c.l.b16 %v622
    %v659 = vunpack.c.l.b16 %v623
    %v660 = vunpack.c.l.b16 %v624
    %v661 = vunpack.c.l.b16 %v625
    %v662 = vunpack.c.l.b16 %v626
    %v663 = vunpack.c.l.b16 %v627
    %v664 = vunpack.c.l.b16 %v628
    %v665 = vunpack.c.l.b16 %v629
    %v666 = vunpack.c.l.b16 %v630
    %v667 = vpack.c.b16 %v652, %v651
    %v668 = vpack.c.b16 %v654, %v653
    %v669 = vpack.c.b16 %v656, %v655
    %v670 = vpack.c.b16 %v658, %v657
    %v671 = vpack.c.b16 %v660, %v659
    %v672 = vpack.c.b16 %v662, %v661
    %v673 = vpack.c.b16 %v664, %v663
    %v674 = vpack.c.b16 %v666, %v665
    %683 = vmatprep.subr.bf16.mxu0 0
    %684 = vmatpush1.bf16.msra.mxu0 %v674
    %685 = vmatprep.subr.bf16.mxu0 0
    %686 = vmatpush1.bf16.msra.mxu0 %v673
    %687 = vmatprep.subr.bf16.mxu0 0
    %688 = vmatpush1.bf16.msra.mxu0 %v672
    %689 = vmatprep.subr.bf16.mxu0 0
    %690 = vmatpush1.bf16.msra.mxu0 %v671
    %691 = vmatprep.subr.bf16.mxu0 0
    %692 = vmatpush1.bf16.msra.mxu0 %v670
    %693 = vmatprep.subr.bf16.mxu0 0
    %694 = vmatpush1.bf16.msra.mxu0 %v669
    %695 = vmatprep.subr.bf16.mxu0 0
    %696 = vmatpush1.bf16.msra.mxu0 %v668
    %697 = vmatprep.subr.bf16.mxu0 0
    %698 = vmatpush1.bf16.msra.mxu0 %v667
    %699 = vmatprep.subr.bf16.mxu0 0
    %700 = vmatpush2.bf16.msra.mxu0 0
    %701 = vmatprep.subr.bf16.mxu0 0
    %702 = vmatpush2.bf16.msra.mxu0 0
    %703 = vmatprep.subr.bf16.mxu0 0
    %704 = vmatpush2.bf16.msra.mxu0 0
    %705 = vmatprep.subr.bf16.mxu0 0
    %706 = vmatpush2.bf16.msra.mxu0 0
    %707 = vmatprep.subr.bf16.mxu0 0
    %708 = vmatpush2.bf16.msra.mxu0 0
    %709 = vmatprep.subr.bf16.mxu0 0
    %710 = vmatpush2.bf16.msra.mxu0 0
    %711 = vmatprep.subr.bf16.mxu0 0
    %712 = vmatpush2.bf16.msra.mxu0 0
    %713 = vmatprep.subr.bf16.mxu0 0
    %714 = vmatpush2.bf16.msra.mxu0 0
    %715 = vmatprep.mubr.bf16.mxu0 0
    %716 = vmatmul.mubr.bf16.gmra.mxu0 %v614
    %v717 = vpop.f32.mrf.mxu0
    %v718 = vadd.f32 %v634, %v717
    %v719 = vpop.f32.mrf.mxu0
    %v720 = vpop.f32.mrf.mxu0
    %v721 = vadd.f32 %v634, %v720
    %v722 = vpop.f32.mrf.mxu0
    %723 = vdwg.mxu0
    %v724 = vadd.f32 %v718, %v86
    %v725 = vadd.f32 %v721, %v87
    %726 = vadd.xlane.f32.xlu0 %v724
    %v727 = vpop.xlane.xlu0 %726
    %728 = vadd.xlane.f32.xlu0 %v725
    %v729 = vpop.xlane.xlu0 %728
    %v730 = vmul.f32 %v727, 0.03125
    %v731 = vmul.f32 %v729, 0.03125
    %v732 = vsub.f32 %v724, %v730
    %v733 = vsub.f32 %v725, %v731
    %v734 = vmul.f32 %v732, %v44
    %v735 = vmul.f32 %v733, %v44
    %v736 = vmul.f32 %v734, %v734
    %v737 = vmul.f32 %v735, %v735
    %738 = vadd.xlane.f32.xlu0 %v736
    %v739 = vpop.xlane.xlu0 %738
    %740 = vadd.xlane.f32.xlu0 %v737
    %v741 = vpop.xlane.xlu0 %740
    %v742 = vmul.f32 %v739, 0.03125
    %v743 = vmul.f32 %v741, 0.03125
    %v744 = vadd.f32 %v742, 1e-05
    %v745 = vadd.f32 %v743, 1e-05
    %v746 = vrsqrt.pop %v744
    %v747 = vrsqrt.pop %v745
    %v748 = vmul.f32 %v734, %v746
    %v749 = vmul.f32 %v735, %v747
    %v750 = vlaneseq
    %v751 = vshrl.u32 %v750, 7
    %v752 = vsub.s32 4, %v751
    %v753 = vrot.slane %v88, %v752
    %v754 = vmul.f32 %v748, %v753
    %v755 = vmul.f32 %v749, %v753
    %v756 = vlaneseq
    %v757 = vshrl.u32 %v756, 7
    %v758 = vsub.s32 5, %v757
    %v759 = vrot.slane %v88, %v758
    %v760 = vadd.f32 %v754, %v759
    %v761 = vadd.f32 %v755, %v759
    %v762 = vpack.c.bf16 %v761, %v760
    %v763 = vld [vmem:[%s4 + $0xc4] sm:$0xf]
    %v764 = vld [vmem:[%s4 + $0xd0] sm:$0xf]
    %v765 = vld [vmem:[%s4 + $0xdc] sm:$0xf]
    %v766 = vld [vmem:[%s4 + $0xe8] sm:$0xf]
    %v767 = vld [vmem:[%s4 + $0xf4] sm:$0xf]
    %v768 = vld [vmem:[%s4 + $0x100] sm:$0xf]
    %v769 = vld [vmem:[%s4 + $0x10c] sm:$0xf]
    %v770 = vld [vmem:[%s4 + $0x118] sm:$0xf]
    %v771 = vld [vmem:[%s4 + $0x124] sm:$0xf]
    %v772 = vld [vmem:[%s4 + $0x130] sm:$0xf]
    %v773 = vld [vmem:[%s4 + $0x13c] sm:$0xf]
    %v774 = vld [vmem:[%s4 + $0x148] sm:$0xf]
    %v775 = vld [vmem:[%s4 + $0x154] sm:$0xf]
    %v776 = vld [vmem:[%s4 + $0x160] sm:$0xf]
    %v777 = vld [vmem:[%s4 + $0x16c] sm:$0xf]
    %v778 = vld [vmem:[%s4 + $0x178] sm:$0xf]
    %v779 = vlaneseq
    %v780 = vshrl.u32 %v779, 7
    %v781 = vsub.s32 6, %v780
    %v782 = vrot.slane %v88, %v781
    %v799 = vunpack.c.l.b16 %v763
    %v800 = vunpack.c.l.b16 %v764
    %v801 = vunpack.c.l.b16 %v765
    %v802 = vunpack.c.l.b16 %v766
    %v803 = vunpack.c.l.b16 %v767
    %v804 = vunpack.c.l.b16 %v768
    %v805 = vunpack.c.l.b16 %v769
    %v806 = vunpack.c.l.b16 %v770
    %v807 = vunpack.c.l.b16 %v771
    %v808 = vunpack.c.l.b16 %v772
    %v809 = vunpack.c.l.b16 %v773
    %v810 = vunpack.c.l.b16 %v774
    %v811 = vunpack.c.l.b16 %v775
    %v812 = vunpack.c.l.b16 %v776
    %v813 = vunpack.c.l.b16 %v777
    %v814 = vunpack.c.l.b16 %v778
    %v815 = vpack.c.b16 %v800, %v799
    %v816 = vpack.c.b16 %v802, %v801
    %v817 = vpack.c.b16 %v804, %v803
    %v818 = vpack.c.b16 %v806, %v805
    %v819 = vpack.c.b16 %v808, %v807
    %v820 = vpack.c.b16 %v810, %v809
    %v821 = vpack.c.b16 %v812, %v811
    %v822 = vpack.c.b16 %v814, %v813
    %831 = vmatprep.subr.bf16.mxu0 0
    %832 = vmatpush1.bf16.msra.mxu0 %v822
    %833 = vmatprep.subr.bf16.mxu0 0
    %834 = vmatpush1.bf16.msra.mxu0 %v821
    %835 = vmatprep.subr.bf16.mxu0 0
    %836 = vmatpush1.bf16.msra.mxu0 %v820
    %837 = vmatprep.subr.bf16.mxu0 0
    %838 = vmatpush1.bf16.msra.mxu0 %v819
    %839 = vmatprep.subr.bf16.mxu0 0
    %840 = vmatpush1.bf16.msra.mxu0 %v818
    %841 = vmatprep.subr.bf16.mxu0 0
    %842 = vmatpush1.bf16.msra.mxu0 %v817
    %843 = vmatprep.subr.bf16.mxu0 0
    %844 = vmatpush1.bf16.msra.mxu0 %v816
    %845 = vmatprep.subr.bf16.mxu0 0
    %846 = vmatpush1.bf16.msra.mxu0 %v815
    %847 = vmatprep.subr.bf16.mxu0 0
    %848 = vmatpush2.bf16.msra.mxu0 0
    %849 = vmatprep.subr.bf16.mxu0 0
    %850 = vmatpush2.bf16.msra.mxu0 0
    %851 = vmatprep.subr.bf16.mxu0 0
    %852 = vmatpush2.bf16.msra.mxu0 0
    %853 = vmatprep.subr.bf16.mxu0 0
    %854 = vmatpush2.bf16.msra.mxu0 0
    %855 = vmatprep.subr.bf16.mxu0 0
    %856 = vmatpush2.bf16.msra.mxu0 0
    %857 = vmatprep.subr.bf16.mxu0 0
    %858 = vmatpush2.bf16.msra.mxu0 0
    %859 = vmatprep.subr.bf16.mxu0 0
    %860 = vmatpush2.bf16.msra.mxu0 0
    %861 = vmatprep.subr.bf16.mxu0 0
    %862 = vmatpush2.bf16.msra.mxu0 0
    %863 = vmatprep.mubr.bf16.mxu0 0
    %864 = vmatmul.mubr.bf16.gmra.mxu0 %v762
    %v865 = vpop.f32.mrf.mxu0
    %v866 = vadd.f32 %v782, %v865
    %v867 = vpop.f32.mrf.mxu0
    %v868 = vpop.f32.mrf.mxu0
    %v869 = vadd.f32 %v782, %v868
    %v870 = vpop.f32.mrf.mxu0
    %871 = vdwg.mxu0
    %v872 = vmul.f32 %v866, 0.5
    %v873 = vmul.f32 %v869, 0.5
    %v874 = vmul.f32 %v866, 0.70710677
    %v875 = vmul.f32 %v869, 0.70710677
    %vm876 = vcmp.lt.f32.partialorder %v874, 0.0
    %vm877 = vcmp.lt.f32.partialorder %v875, 0.0
    %v878 = vsel %vm876, -1.0, 1.0
    %v879 = vsel %vm877, -1.0, 1.0
    %v880 = vand.u32 2147483647, %v874
    %v881 = vand.u32 2147483647, %v875
    %v882 = vmul.f32 %v880, 0.3275911
    %v883 = vmul.f32 %v881, 0.3275911
    %v884 = vadd.f32 %v882, 1.0
    %v885 = vadd.f32 %v883, 1.0
    %v886 = vrcp.pop %v884
    %v887 = vmul.f32 1.0, %v886
    %v888 = vrcp.pop %v885
    %v889 = vmul.f32 1.0, %v888
    %v890 = vmul.f32 %v887, 1.0614054
    %v891 = vmul.f32 %v889, 1.0614054
    %v892 = vadd.f32 %v890, -1.4531521
    %v893 = vadd.f32 %v891, -1.4531521
    %v894 = vmul.f32 %v892, %v887
    %v895 = vmul.f32 %v893, %v889
    %v896 = vadd.f32 %v894, 1.4214138
    %v897 = vadd.f32 %v895, 1.4214138
    %v898 = vmul.f32 %v896, %v887
    %v899 = vmul.f32 %v897, %v889
    %v900 = vadd.f32 %v898, -0.28449672
    %v901 = vadd.f32 %v899, -0.28449672
    %v902 = vmul.f32 %v900, %v887
    %v903 = vmul.f32 %v901, %v889
    %v904 = vadd.f32 %v902, 0.2548296
    %v905 = vadd.f32 %v903, 0.2548296
    %v906 = vmul.f32 %v904, %v887
    %v907 = vmul.f32 %v905, %v889
    %v908 = vsub.f32 0.0, %v880
    %v909 = vsub.f32 0.0, %v881
    %v910 = vmul.f32 %v908, %v880
    %v911 = vmul.f32 %v909, %v881
    %v912 = vmul.f32 %v910, 1.442695
    %v913 = vpow.pop %v912
    %v914 = vmul.f32 %v911, 1.442695
    %v915 = vpow.pop %v914
    %v916 = vmul.f32 %v906, %v913
    %v917 = vmul.f32 %v907, %v915
    %v918 = vsub.f32 1.0, %v916
    %v919 = vsub.f32 1.0, %v917
    %v920 = vmul.f32 %v878, %v918
    %v921 = vmul.f32 %v879, %v919
    %v922 = vadd.f32 %v920, 1.0
    %v923 = vadd.f32 %v921, 1.0
    %v924 = vmul.f32 %v872, %v922
    %v925 = vmul.f32 %v873, %v923
    %v926 = vpack.c.bf16 %v925, %v924
    %v927 = vld [vmem:[%s4 + $0xc8] sm:$0xf]
    %v928 = vld [vmem:[%s4 + $0xd4] sm:$0xf]
    %v929 = vld [vmem:[%s4 + $0xe0] sm:$0xf]
    %v930 = vld [vmem:[%s4 + $0xec] sm:$0xf]
    %v931 = vld [vmem:[%s4 + $0xf8] sm:$0xf]
    %v932 = vld [vmem:[%s4 + $0x104] sm:$0xf]
    %v933 = vld [vmem:[%s4 + $0x110] sm:$0xf]
    %v934 = vld [vmem:[%s4 + $0x11c] sm:$0xf]
    %v935 = vld [vmem:[%s4 + $0x128] sm:$0xf]
    %v936 = vld [vmem:[%s4 + $0x134] sm:$0xf]
    %v937 = vld [vmem:[%s4 + $0x140] sm:$0xf]
    %v938 = vld [vmem:[%s4 + $0x14c] sm:$0xf]
    %v939 = vld [vmem:[%s4 + $0x158] sm:$0xf]
    %v940 = vld [vmem:[%s4 + $0x164] sm:$0xf]
    %v941 = vld [vmem:[%s4 + $0x170] sm:$0xf]
    %v942 = vld [vmem:[%s4 + $0x17c] sm:$0xf]
    %v943 = vlaneseq
    %v944 = vshrl.u32 %v943, 7
    %v945 = vsub.s32 7, %v944
    %v946 = vrot.slane %v88, %v945
    %v963 = vunpack.c.l.b16 %v927
    %v964 = vunpack.c.l.b16 %v928
    %v965 = vunpack.c.l.b16 %v929
    %v966 = vunpack.c.l.b16 %v930
    %v967 = vunpack.c.l.b16 %v931
    %v968 = vunpack.c.l.b16 %v932
    %v969 = vunpack.c.l.b16 %v933
    %v970 = vunpack.c.l.b16 %v934
    %v971 = vunpack.c.l.b16 %v935
    %v972 = vunpack.c.l.b16 %v936
    %v973 = vunpack.c.l.b16 %v937
    %v974 = vunpack.c.l.b16 %v938
    %v975 = vunpack.c.l.b16 %v939
    %v976 = vunpack.c.l.b16 %v940
    %v977 = vunpack.c.l.b16 %v941
    %v978 = vunpack.c.l.b16 %v942
    %v979 = vpack.c.b16 %v964, %v963
    %v980 = vpack.c.b16 %v966, %v965
    %v981 = vpack.c.b16 %v968, %v967
    %v982 = vpack.c.b16 %v970, %v969
    %v983 = vpack.c.b16 %v972, %v971
    %v984 = vpack.c.b16 %v974, %v973
    %v985 = vpack.c.b16 %v976, %v975
    %v986 = vpack.c.b16 %v978, %v977
    %995 = vmatprep.subr.bf16.mxu0 0
    %996 = vmatpush1.bf16.msra.mxu0 %v986
    %997 = vmatprep.subr.bf16.mxu0 0
    %998 = vmatpush1.bf16.msra.mxu0 %v985
    %999 = vmatprep.subr.bf16.mxu0 0
    %1000 = vmatpush1.bf16.msra.mxu0 %v984
    %1001 = vmatprep.subr.bf16.mxu0 0
    %1002 = vmatpush1.bf16.msra.mxu0 %v983
    %1003 = vmatprep.subr.bf16.mxu0 0
    %1004 = vmatpush1.bf16.msra.mxu0 %v982
    %1005 = vmatprep.subr.bf16.mxu0 0
    %1006 = vmatpush1.bf16.msra.mxu0 %v981
    %1007 = vmatprep.subr.bf16.mxu0 0
    %1008 = vmatpush1.bf16.msra.mxu0 %v980
    %1009 = vmatprep.subr.bf16.mxu0 0
    %1010 = vmatpush1.bf16.msra.mxu0 %v979
    %1011 = vmatprep.subr.bf16.mxu0 0
    %1012 = vmatpush2.bf16.msra.mxu0 0
    %1013 = vmatprep.subr.bf16.mxu0 0
    %1014 = vmatpush2.bf16.msra.mxu0 0
    %1015 = vmatprep.subr.bf16.mxu0 0
    %1016 = vmatpush2.bf16.msra.mxu0 0
    %1017 = vmatprep.subr.bf16.mxu0 0
    %1018 = vmatpush2.bf16.msra.mxu0 0
    %1019 = vmatprep.subr.bf16.mxu0 0
    %1020 = vmatpush2.bf16.msra.mxu0 0
    %1021 = vmatprep.subr.bf16.mxu0 0
    %1022 = vmatpush2.bf16.msra.mxu0 0
    %1023 = vmatprep.subr.bf16.mxu0 0
    %1024 = vmatpush2.bf16.msra.mxu0 0
    %1025 = vmatprep.subr.bf16.mxu0 0
    %1026 = vmatpush2.bf16.msra.mxu0 0
    %1027 = vmatprep.mubr.bf16.mxu0 0
    %1028 = vmatmul.mubr.bf16.gmra.mxu0 %v926
    %v1029 = vpop.f32.mrf.mxu0
    %v1030 = vadd.f32 %v946, %v1029
    %v1031 = vpop.f32.mrf.mxu0
    %v1032 = vpop.f32.mrf.mxu0
    %v1033 = vadd.f32 %v946, %v1032
    %v1034 = vpop.f32.mrf.mxu0
    %1035 = vdwg.mxu0
    %v1036 = vadd.f32 %v1030, %v760
    %v1037 = vadd.f32 %v1033, %v761
    %1038 = vadd.xlane.f32.xlu0 %v1036
    %v1039 = vpop.xlane.xlu0 %1038
    %1040 = vadd.xlane.f32.xlu0 %v1037
    %v1041 = vpop.xlane.xlu0 %1040
    %v1042 = vmul.f32 %v1039, 0.03125
    %v1043 = vmul.f32 %v1041, 0.03125
    %v1044 = vsub.f32 %v1036, %v1042
    %v1045 = vsub.f32 %v1037, %v1043
    %v1046 = vmul.f32 %v1044, %v44
    %v1047 = vmul.f32 %v1045, %v44
    %v1048 = vmul.f32 %v1046, %v1046
    %v1049 = vmul.f32 %v1047, %v1047
    %1050 = vadd.xlane.f32.xlu0 %v1048
    %v1051 = vpop.xlane.xlu0 %1050
    %1052 = vadd.xlane.f32.xlu0 %v1049
    %v1053 = vpop.xlane.xlu0 %1052
    %v1054 = vmul.f32 %v1051, 0.03125
    %v1055 = vmul.f32 %v1053, 0.03125
    %v1056 = vadd.f32 %v1054, 1e-05
    %v1057 = vadd.f32 %v1055, 1e-05
    %v1058 = vrsqrt.pop %v1056
    %v1059 = vrsqrt.pop %v1057
    %v1060 = vmul.f32 %v1046, %v1058
    %v1061 = vmul.f32 %v1047, %v1059
    %v1062 = vlaneseq
    %v1063 = vshrl.u32 %v1062, 7
    %v1064 = vsub.s32 0, %v1063
    %v1065 = vrot.slane %v89, %v1064
    %v1066 = vmul.f32 %v1060, %v1065
    %v1067 = vmul.f32 %v1061, %v1065
    %v1068 = vlaneseq
    %v1069 = vshrl.u32 %v1068, 7
    %v1070 = vsub.s32 1, %v1069
    %v1071 = vrot.slane %v89, %v1070
    %v1072 = vadd.f32 %v1066, %v1071
    %v1073 = vadd.f32 %v1067, %v1071
    %s1074 = scalar_lea.vmem [#allocation2], 16
    %v1075 = vld [vmem:[%s1074] sm:$0xff]
    %v1076 = vld [vmem:[%s1074 + $0x8] sm:$0xff]
    %v1077 = vpack.c.bf16 %v1073, %v1072
    %s1078 = scalar_lea.vmem %s4, 384
    %v1079 = vld [vmem:[%s1078] sm:$0xff]
    %v1080 = vld [vmem:[%s1078 + $0x8] sm:$0xf]
    %v1081 = vld [vmem:[%s1078 + $0xc] sm:$0xff]
    %v1082 = vld [vmem:[%s1078 + $0x14] sm:$0xf]
    %v1083 = vld [vmem:[%s1078 + $0x18] sm:$0xff]
    %v1084 = vld [vmem:[%s1078 + $0x20] sm:$0xf]
    %v1085 = vld [vmem:[%s1078 + $0x24] sm:$0xff]
    %v1086 = vld [vmem:[%s1078 + $0x2c] sm:$0xf]
    %v1087 = vld [vmem:[%s1078 + $0x30] sm:$0xff]
    %v1088 = vld [vmem:[%s1078 + $0x38] sm:$0xf]
    %v1089 = vld [vmem:[%s1078 + $0x3c] sm:$0xff]
    %v1090 = vld [vmem:[%s1078 + $0x44] sm:$0xf]
    %v1091 = vld [vmem:[%s1078 + $0x48] sm:$0xff]
    %v1092 = vld [vmem:[%s1078 + $0x50] sm:$0xf]
    %v1093 = vld [vmem:[%s1078 + $0x54] sm:$0xff]
    %v1094 = vld [vmem:[%s1078 + $0x5c] sm:$0xf]
    %v1095 = vld [vmem:[%s1078 + $0x60] sm:$0xff]
    %v1096 = vld [vmem:[%s1078 + $0x68] sm:$0xf]
    %v1097 = vld [vmem:[%s1078 + $0x6c] sm:$0xff]
    %v1098 = vld [vmem:[%s1078 + $0x74] sm:$0xf]
    %v1099 = vld [vmem:[%s1078 + $0x78] sm:$0xff]
    %v1100 = vld [vmem:[%s1078 + $0x80] sm:$0xf]
    %v1101 = vld [vmem:[%s1078 + $0x84] sm:$0xff]
    %v1102 = vld [vmem:[%s1078 + $0x8c] sm:$0xf]
    %v1103 = vld [vmem:[%s1078 + $0x90] sm:$0xff]
    %v1104 = vld [vmem:[%s1078 + $0x98] sm:$0xf]
    %v1105 = vld [vmem:[%s1078 + $0x9c] sm:$0xff]
    %v1106 = vld [vmem:[%s1078 + $0xa4] sm:$0xf]
    %v1107 = vld [vmem:[%s1078 + $0xa8] sm:$0xff]
    %v1108 = vld [vmem:[%s1078 + $0xb0] sm:$0xf]
    %v1109 = vld [vmem:[%s1078 + $0xb4] sm:$0xff]
    %v1110 = vld [vmem:[%s1078 + $0xbc] sm:$0xf]
    %v1143 = vunpack.c.l.b16 %v1079
    %v1144 = vunpack.c.h.b16 %v1079
    %v1145 = vunpack.c.l.b16 %v1080
    %v1146 = vunpack.c.l.b16 %v1081
    %v1147 = vunpack.c.h.b16 %v1081
    %v1148 = vunpack.c.l.b16 %v1082
    %v1149 = vunpack.c.l.b16 %v1083
    %v1150 = vunpack.c.h.b16 %v1083
    %v1151 = vunpack.c.l.b16 %v1084
    %v1152 = vunpack.c.l.b16 %v1085
    %v1153 = vunpack.c.h.b16 %v1085
    %v1154 = vunpack.c.l.b16 %v1086
    %v1155 = vunpack.c.l.b16 %v1087
    %v1156 = vunpack.c.h.b16 %v1087
    %v1157 = vunpack.c.l.b16 %v1088
    %v1158 = vunpack.c.l.b16 %v1089
    %v1159 = vunpack.c.h.b16 %v1089
    %v1160 = vunpack.c.l.b16 %v1090
    %v1161 = vunpack.c.l.b16 %v1091
    %v1162 = vunpack.c.h.b16 %v1091
    %v1163 = vunpack.c.l.b16 %v1092
    %v1164 = vunpack.c.l.b16 %v1093
    %v1165 = vunpack.c.h.b16 %v1093
    %v1166 = vunpack.c.l.b16 %v1094
    %v1167 = vunpack.c.l.b16 %v1095
    %v1168 = vunpack.c.h.b16 %v1095
    %v1169 = vunpack.c.l.b16 %v1096
    %v1170 = vunpack.c.l.b16 %v1097
    %v1171 = vunpack.c.h.b16 %v1097
    %v1172 = vunpack.c.l.b16 %v1098
    %v1173 = vunpack.c.l.b16 %v1099
    %v1174 = vunpack.c.h.b16 %v1099
    %v1175 = vunpack.c.l.b16 %v1100
    %v1176 = vunpack.c.l.b16 %v1101
    %v1177 = vunpack.c.h.b16 %v1101
    %v1178 = vunpack.c.l.b16 %v1102
    %v1179 = vunpack.c.l.b16 %v1103
    %v1180 = vunpack.c.h.b16 %v1103
    %v1181 = vunpack.c.l.b16 %v1104
    %v1182 = vunpack.c.l.b16 %v1105
    %v1183 = vunpack.c.h.b16 %v1105
    %v1184 = vunpack.c.l.b16 %v1106
    %v1185 = vunpack.c.l.b16 %v1107
    %v1186 = vunpack.c.h.b16 %v1107
    %v1187 = vunpack.c.l.b16 %v1108
    %v1188 = vunpack.c.l.b16 %v1109
    %v1189 = vunpack.c.h.b16 %v1109
    %v1190 = vunpack.c.l.b16 %v1110
    %v1191 = vpack.c.b16 %v1146, %v1143
    %v1192 = vpack.c.b16 %v1147, %v1144
    %v1193 = vpack.c.b16 %v1148, %v1145
    %v1194 = vpack.c.b16 %v1152, %v1149
    %v1195 = vpack.c.b16 %v1153, %v1150
    %v1196 = vpack.c.b16 %v1154, %v1151
    %v1197 = vpack.c.b16 %v1158, %v1155
    %v1198 = vpack.c.b16 %v1159, %v1156
    %v1199 = vpack.c.b16 %v1160, %v1157
    %v1200 = vpack.c.b16 %v1164, %v1161
    %v1201 = vpack.c.b16 %v1165, %v1162
    %v1202 = vpack.c.b16 %v1166, %v1163
    %v1203 = vpack.c.b16 %v1170, %v1167
    %v1204 = vpack.c.b16 %v1171, %v1168
    %v1205 = vpack.c.b16 %v1172, %v1169
    %v1206 = vpack.c.b16 %v1176, %v1173
    %v1207 = vpack.c.b16 %v1177, %v1174
    %v1208 = vpack.c.b16 %v1178, %v1175
    %v1209 = vpack.c.b16 %v1182, %v1179
    %v1210 = vpack.c.b16 %v1183, %v1180
    %v1211 = vpack.c.b16 %v1184, %v1181
    %v1212 = vpack.c.b16 %v1188, %v1185
    %v1213 = vpack.c.b16 %v1189, %v1186
    %v1214 = vpack.c.b16 %v1190, %v1187
    %1239 = vmatprep.subr.bf16.mxu0 %v1213
    %1240 = vmatpush1.bf16.msra.mxu0 %v1212
    %1241 = vmatprep.subr.bf16.mxu0 %v1210
    %1242 = vmatpush1.bf16.msra.mxu0 %v1209
    %1243 = vmatprep.subr.bf16.mxu0 %v1207
    %1244 = vmatpush1.bf16.msra.mxu0 %v1206
    %1245 = vmatprep.subr.bf16.mxu0 %v1204
    %1246 = vmatpush1.bf16.msra.mxu0 %v1203
    %1247 = vmatprep.subr.bf16.mxu0 %v1201
    %1248 = vmatpush1.bf16.msra.mxu0 %v1200
    %1249 = vmatprep.subr.bf16.mxu0 %v1198
    %1250 = vmatpush1.bf16.msra.mxu0 %v1197
    %1251 = vmatprep.subr.bf16.mxu0 %v1195
    %1252 = vmatpush1.bf16.msra.mxu0 %v1194
    %1253 = vmatprep.subr.bf16.mxu0 %v1192
    %1254 = vmatpush1.bf16.msra.mxu0 %v1191
    %1255 = vmatprep.subr.bf16.mxu0 0
    %1256 = vmatpush2.bf16.msra.mxu0 0
    %1257 = vmatprep.subr.bf16.mxu0 0
    %1258 = vmatpush2.bf16.msra.mxu0 0
    %1259 = vmatprep.subr.bf16.mxu0 0
    %1260 = vmatpush2.bf16.msra.mxu0 0
    %1261 = vmatprep.subr.bf16.mxu0 0
    %1262 = vmatpush2.bf16.msra.mxu0 0
    %1263 = vmatprep.subr.bf16.mxu0 0
    %1264 = vmatpush2.bf16.msra.mxu0 0
    %1265 = vmatprep.subr.bf16.mxu0 0
    %1266 = vmatpush2.bf16.msra.mxu0 0
    %1267 = vmatprep.subr.bf16.mxu0 0
    %1268 = vmatpush2.bf16.msra.mxu0 0
    %1269 = vmatprep.subr.bf16.mxu0 0
    %1270 = vmatpush2.bf16.msra.mxu0 0
    %1271 = vmatprep.mubr.bf16.mxu0 0
    %1272 = vmatmul.mubr.bf16.gmra.mxu0 %v1077
    %v1273 = vpop.f32.mrf.mxu0
    %v1274 = vadd.f32 0.0, %v1273
    %v1275 = vpop.f32.mrf.mxu0
    %v1276 = vadd.f32 0.0, %v1275
    %v1277 = vpop.f32.mrf.mxu0
    %v1278 = vadd.f32 0.0, %v1277
    %v1279 = vpop.f32.mrf.mxu0
    %v1280 = vadd.f32 0.0, %v1279
    %1281 = vdwg.mxu0
    %1282 = vmatprep.subr.bf16.mxu0 0
    %1283 = vmatpush1.bf16.msra.mxu0 %v1214
    %1284 = vmatprep.subr.bf16.mxu0 0
    %1285 = vmatpush1.bf16.msra.mxu0 %v1211
    %1286 = vmatprep.subr.bf16.mxu0 0
    %1287 = vmatpush1.bf16.msra.mxu0 %v1208
    %1288 = vmatprep.subr.bf16.mxu0 0
    %1289 = vmatpush1.bf16.msra.mxu0 %v1205
    %1290 = vmatprep.subr.bf16.mxu0 0
    %1291 = vmatpush1.bf16.msra.mxu0 %v1202
    %1292 = vmatprep.subr.bf16.mxu0 0
    %1293 = vmatpush1.bf16.msra.mxu0 %v1199
    %1294 = vmatprep.subr.bf16.mxu0 0
    %1295 = vmatpush1.bf16.msra.mxu0 %v1196
    %1296 = vmatprep.subr.bf16.mxu0 0
    %1297 = vmatpush1.bf16.msra.mxu0 %v1193
    %1298 = vmatprep.subr.bf16.mxu0 0
    %1299 = vmatpush2.bf16.msra.mxu0 0
    %1300 = vmatprep.subr.bf16.mxu0 0
    %1301 = vmatpush2.bf16.msra.mxu0 0
    %1302 = vmatprep.subr.bf16.mxu0 0
    %1303 = vmatpush2.bf16.msra.mxu0 0
    %1304 = vmatprep.subr.bf16.mxu0 0
    %1305 = vmatpush2.bf16.msra.mxu0 0
    %1306 = vmatprep.subr.bf16.mxu0 0
    %1307 = vmatpush2.bf16.msra.mxu0 0
    %1308 = vmatprep.subr.bf16.mxu0 0
    %1309 = vmatpush2.bf16.msra.mxu0 0
    %1310 = vmatprep.subr.bf16.mxu0 0
    %1311 = vmatpush2.bf16.msra.mxu0 0
    %1312 = vmatprep.subr.bf16.mxu0 0
    %1313 = vmatpush2.bf16.msra.mxu0 0
    %1314 = vmatprep.mubr.bf16.mxu0 0
    %1315 = vmatmul.mubr.bf16.gmra.mxu0 %v1077
    %v1316 = vpop.f32.mrf.mxu0
    %v1317 = vadd.f32 0.0, %v1316
    %v1318 = vpop.f32.mrf.mxu0
    %v1319 = vpop.f32.mrf.mxu0
    %v1320 = vadd.f32 0.0, %v1319
    %v1321 = vpop.f32.mrf.mxu0
    %1322 = vdwg.mxu0
    %v1323 = vlaneseq
    %v1324 = vshrl.u32 %v1323, 7
    %v1325 = vsub.s32 0, %v1324
    %v1326 = vrot.slane %v1075, %v1325
    %v1327 = vadd.f32 %v1274, %v1326
    %v1328 = vadd.f32 %v1278, %v1326
    %v1329 = vlaneseq
    %v1330 = vshrl.u32 %v1329, 7
    %v1331 = vsub.s32 1, %v1330
    %v1332 = vrot.slane %v1075, %v1331
    %v1333 = vadd.f32 %v1276, %v1332
    %v1334 = vadd.f32 %v1280, %v1332
    %v1335 = vlaneseq
    %v1336 = vshrl.u32 %v1335, 7
    %v1337 = vsub.s32 2, %v1336
    %v1338 = vrot.slane %v1075, %v1337
    %v1339 = vadd.f32 %v1317, %v1338
    %v1340 = vadd.f32 %v1320, %v1338
    %v1341 = vpack.c.bf16 %v1328, %v1327
    %v1342 = vpack.c.bf16 %v1334, %v1333
    %v1343 = vpack.c.bf16 %v1340, %v1339
    %v1345 = vsel %vm356, %v1341, 0
    %v1348 = vsel %vm356, %v1342, 0
    %1350 = vmatprep.subr.bf16.mxu0 0
    %1351 = vmatpush1.bf16.xpose.msra.mxu0 0
    %1352 = vmatprep.subr.bf16.mxu0 0
    %1353 = vmatpush1.bf16.xpose.msra.mxu0 0
    %1354 = vmatprep.subr.bf16.mxu0 0
    %1355 = vmatpush1.bf16.xpose.msra.mxu0 0
    %1356 = vmatprep.subr.bf16.mxu0 0
    %1357 = vmatpush1.bf16.xpose.msra.mxu0 0
    %1358 = vmatprep.subr.bf16.mxu0 0
    %1359 = vmatpush1.bf16.xpose.msra.mxu0 0
    %1360 = vmatprep.subr.bf16.mxu0 0
    %1361 = vmatpush1.bf16.xpose.msra.mxu0 0
    %1362 = vmatprep.subr.bf16.mxu0 0
    %1363 = vmatpush1.bf16.xpose.msra.mxu0 0
    %1364 = vmatprep.subr.bf16.mxu0 0
    %1365 = vmatpush1.bf16.xpose.msra.mxu0 %v1348
    %1366 = vmatprep.subr.bf16.mxu0 0
    %1367 = vmatpush2.bf16.xpose.msra.mxu0 0
    %1368 = vmatprep.subr.bf16.mxu0 0
    %1369 = vmatpush2.bf16.xpose.msra.mxu0 0
    %1370 = vmatprep.subr.bf16.mxu0 0
    %1371 = vmatpush2.bf16.xpose.msra.mxu0 0
    %1372 = vmatprep.subr.bf16.mxu0 0
    %1373 = vmatpush2.bf16.xpose.msra.mxu0 0
    %1374 = vmatprep.subr.bf16.mxu0 0
    %1375 = vmatpush2.bf16.xpose.msra.mxu0 0
    %1376 = vmatprep.subr.bf16.mxu0 0
    %1377 = vmatpush2.bf16.xpose.msra.mxu0 0
    %1378 = vmatprep.subr.bf16.mxu0 0
    %1379 = vmatpush2.bf16.xpose.msra.mxu0 0
    %1380 = vmatprep.subr.bf16.mxu0 0
    %1381 = vmatpush2.bf16.xpose.msra.mxu0 0
    %1382 = vmatprep.mubr.bf16.mxu0 0
    %1383 = vmatmul.mubr.bf16.gmra.mxu0 %v1345
    %v1384 = vpop.f32.mrf.mxu0
    %v1385 = vadd.f32 0.0, %v1384
    %v1386 = vpop.f32.mrf.mxu0
    %v1387 = vpop.f32.mrf.mxu0
    %v1388 = vadd.f32 0.0, %v1387
    %v1389 = vpop.f32.mrf.mxu0
    %1390 = vdwg.mxu0
    %1392 = vrot.lane.b32.xlu0 %v1341, 64
    %v1393 = vpop.permute.xlu0 %1392
    %1395 = vrot.lane.b32.xlu0 %v1342, 64
    %v1396 = vpop.permute.xlu0 %1395
    %v1398 = vsel %vm356, %v1393, 0
    %v1401 = vsel %vm356, %v1396, 0
    %1403 = vmatprep.subr.bf16.mxu0 0
    %1404 = vmatpush1.bf16.xpose.msra.mxu0 0
    %1405 = vmatprep.subr.bf16.mxu0 0
    %1406 = vmatpush1.bf16.xpose.msra.mxu0 0
    %1407 = vmatprep.subr.bf16.mxu0 0
    %1408 = vmatpush1.bf16.xpose.msra.mxu0 0
    %1409 = vmatprep.subr.bf16.mxu0 0
    %1410 = vmatpush1.bf16.xpose.msra.mxu0 0
    %1411 = vmatprep.subr.bf16.mxu0 0
    %1412 = vmatpush1.bf16.xpose.msra.mxu0 0
    %1413 = vmatprep.subr.bf16.mxu0 0
    %1414 = vmatpush1.bf16.xpose.msra.mxu0 0
    %1415 = vmatprep.subr.bf16.mxu0 0
    %1416 = vmatpush1.bf16.xpose.msra.mxu0 0
    %1417 = vmatprep.subr.bf16.mxu0 0
    %1418 = vmatpush1.bf16.xpose.msra.mxu0 %v1401
    %1419 = vmatprep.subr.bf16.mxu0 0
    %1420 = vmatpush2.bf16.xpose.msra.mxu0 0
    %1421 = vmatprep.subr.bf16.mxu0 0
    %1422 = vmatpush2.bf16.xpose.msra.mxu0 0
    %1423 = vmatprep.subr.bf16.mxu0 0
    %1424 = vmatpush2.bf16.xpose.msra.mxu0 0
    %1425 = vmatprep.subr.bf16.mxu0 0
    %1426 = vmatpush2.bf16.xpose.msra.mxu0 0
    %1427 = vmatprep.subr.bf16.mxu0 0
    %1428 = vmatpush2.bf16.xpose.msra.mxu0 0
    %1429 = vmatprep.subr.bf16.mxu0 0
    %1430 = vmatpush2.bf16.xpose.msra.mxu0 0
    %1431 = vmatprep.subr.bf16.mxu0 0
    %1432 = vmatpush2.bf16.xpose.msra.mxu0 0
    %1433 = vmatprep.subr.bf16.mxu0 0
    %1434 = vmatpush2.bf16.xpose.msra.mxu0 0
    %1435 = vmatprep.mubr.bf16.mxu0 0
    %1436 = vmatmul.mubr.bf16.gmra.mxu0 %v1398
    %v1437 = vpop.f32.mrf.mxu0
    %v1438 = vadd.f32 0.0, %v1437
    %v1439 = vpop.f32.mrf.mxu0
    %v1440 = vpop.f32.mrf.mxu0
    %v1441 = vadd.f32 0.0, %v1440
    %v1442 = vpop.f32.mrf.mxu0
    %1443 = vdwg.mxu0
    %v1444 = vmul.f32 %v1385, 0.25
    %v1445 = vmul.f32 %v1388, 0.25
    %v1446 = vmul.f32 %v1438, 0.25
    %v1447 = vmul.f32 %v1441, 0.25
    %v1448 = vadd.f32 %v1444, %v45
    %v1449 = vadd.f32 %v1445, %v46
    %v1450 = vadd.f32 %v1446, %v47
    %v1451 = vadd.f32 %v1447, %v48
    %v1452 = vsel %vm465, %v1448, -inf
    %1453 = vmax.xlane.f32.xlu0 %v1452
    %v1454 = vpop.xlane.xlu0 %1453
    %v1455 = vsel %vm465, %v1449, -inf
    %1456 = vmax.xlane.f32.xlu0 %v1455
    %v1457 = vpop.xlane.xlu0 %1456
    %v1458 = vsel %vm465, %v1450, -inf
    %1459 = vmax.xlane.f32.xlu0 %v1458
    %v1460 = vpop.xlane.xlu0 %1459
    %v1461 = vsel %vm465, %v1451, -inf
    %1462 = vmax.xlane.f32.xlu0 %v1461
    %v1463 = vpop.xlane.xlu0 %1462
    %v1464 = vsub.f32 %v1448, %v1454
    %v1465 = vsub.f32 %v1449, %v1457
    %v1466 = vsub.f32 %v1450, %v1460
    %v1467 = vsub.f32 %v1451, %v1463
    %v1468 = vmul.f32 %v1464, 1.442695
    %v1469 = vpow.pop %v1468
    %v1470 = vmul.f32 %v1465, 1.442695
    %v1471 = vpow.pop %v1470
    %v1472 = vmul.f32 %v1466, 1.442695
    %v1473 = vpow.pop %v1472
    %v1474 = vmul.f32 %v1467, 1.442695
    %v1475 = vpow.pop %v1474
    %v1476 = vsel %vm465, %v1469, 0.0
    %1477 = vadd.xlane.f32.xlu0 %v1476
    %v1478 = vpop.xlane.xlu0 %1477
    %v1479 = vsel %vm465, %v1471, 0.0
    %1480 = vadd.xlane.f32.xlu0 %v1479
    %v1481 = vpop.xlane.xlu0 %1480
    %v1482 = vsel %vm465, %v1473, 0.0
    %1483 = vadd.xlane.f32.xlu0 %v1482
    %v1484 = vpop.xlane.xlu0 %1483
    %v1485 = vsel %vm465, %v1475, 0.0
    %1486 = vadd.xlane.f32.xlu0 %v1485
    %v1487 = vpop.xlane.xlu0 %1486
    %v1488 = vrcp.pop %v1478
    %v1489 = vmul.f32 %v1469, %v1488
    %v1490 = vrcp.pop %v1481
    %v1491 = vmul.f32 %v1471, %v1490
    %v1492 = vrcp.pop %v1484
    %v1493 = vmul.f32 %v1473, %v1492
    %v1494 = vrcp.pop %v1487
    %v1495 = vmul.f32 %v1475, %v1494
    %v1496 = vpack.c.bf16 %v1491, %v1489
    %v1497 = vpack.c.bf16 %v1495, %v1493
    %v1499 = vsel %vm465, %v1496, 0
    %1501 = vmatprep.subr.bf16.mxu0 0
    %1502 = vmatpush1.bf16.msra.mxu0 0
    %1503 = vmatprep.subr.bf16.mxu0 0
    %1504 = vmatpush1.bf16.msra.mxu0 0
    %1505 = vmatprep.subr.bf16.mxu0 0
    %1506 = vmatpush1.bf16.msra.mxu0 0
    %1507 = vmatprep.subr.bf16.mxu0 0
    %1508 = vmatpush1.bf16.msra.mxu0 0
    %1509 = vmatprep.subr.bf16.mxu0 0
    %1510 = vmatpush1.bf16.msra.mxu0 0
    %1511 = vmatprep.subr.bf16.mxu0 0
    %1512 = vmatpush1.bf16.msra.mxu0 0
    %1513 = vmatprep.subr.bf16.mxu0 0
    %1514 = vmatpush1.bf16.msra.mxu0 0
    %1515 = vmatprep.subr.bf16.mxu0 0
    %1516 = vmatpush1.bf16.msra.mxu0 %v1343
    %1517 = vmatprep.subr.bf16.mxu0 0
    %1518 = vmatpush2.bf16.msra.mxu0 0
    %1519 = vmatprep.subr.bf16.mxu0 0
    %1520 = vmatpush2.bf16.msra.mxu0 0
    %1521 = vmatprep.subr.bf16.mxu0 0
    %1522 = vmatpush2.bf16.msra.mxu0 0
    %1523 = vmatprep.subr.bf16.mxu0 0
    %1524 = vmatpush2.bf16.msra.mxu0 0
    %1525 = vmatprep.subr.bf16.mxu0 0
    %1526 = vmatpush2.bf16.msra.mxu0 0
    %1527 = vmatprep.subr.bf16.mxu0 0
    %1528 = vmatpush2.bf16.msra.mxu0 0
    %1529 = vmatprep.subr.bf16.mxu0 0
    %1530 = vmatpush2.bf16.msra.mxu0 0
    %1531 = vmatprep.subr.bf16.mxu0 0
    %1532 = vmatpush2.bf16.msra.mxu0 0
    %1533 = vmatprep.mubr.bf16.mxu0 0
    %1534 = vmatmul.mubr.bf16.gmra.mxu0 %v1499
    %v1535 = vpop.f32.mrf.mxu0
    %v1536 = vadd.f32 0.0, %v1535
    %v1537 = vpop.f32.mrf.mxu0
    %v1538 = vpop.f32.mrf.mxu0
    %v1539 = vadd.f32 0.0, %v1538
    %v1540 = vpop.f32.mrf.mxu0
    %1541 = vdwg.mxu0
    %1543 = vrot.lane.b32.xlu0 %v1343, 64
    %v1544 = vpop.permute.xlu0 %1543
    %v1547 = vsel %vm465, %v1497, 0
    %1549 = vmatprep.subr.bf16.mxu0 0
    %1550 = vmatpush1.bf16.msra.mxu0 0
    %1551 = vmatprep.subr.bf16.mxu0 0
    %1552 = vmatpush1.bf16.msra.mxu0 0
    %1553 = vmatprep.subr.bf16.mxu0 0
    %1554 = vmatpush1.bf16.msra.mxu0 0
    %1555 = vmatprep.subr.bf16.mxu0 0
    %1556 = vmatpush1.bf16.msra.mxu0 0
    %1557 = vmatprep.subr.bf16.mxu0 0
    %1558 = vmatpush1.bf16.msra.mxu0 0
    %1559 = vmatprep.subr.bf16.mxu0 0
    %1560 = vmatpush1.bf16.msra.mxu0 0
    %1561 = vmatprep.subr.bf16.mxu0 0
    %1562 = vmatpush1.bf16.msra.mxu0 0
    %1563 = vmatprep.subr.bf16.mxu0 0
    %1564 = vmatpush1.bf16.msra.mxu0 %v1544
    %1565 = vmatprep.subr.bf16.mxu0 0
    %1566 = vmatpush2.bf16.msra.mxu0 0
    %1567 = vmatprep.subr.bf16.mxu0 0
    %1568 = vmatpush2.bf16.msra.mxu0 0
    %1569 = vmatprep.subr.bf16.mxu0 0
    %1570 = vmatpush2.bf16.msra.mxu0 0
    %1571 = vmatprep.subr.bf16.mxu0 0
    %1572 = vmatpush2.bf16.msra.mxu0 0
    %1573 = vmatprep.subr.bf16.mxu0 0
    %1574 = vmatpush2.bf16.msra.mxu0 0
    %1575 = vmatprep.subr.bf16.mxu0 0
    %1576 = vmatpush2.bf16.msra.mxu0 0
    %1577 = vmatprep.subr.bf16.mxu0 0
    %1578 = vmatpush2.bf16.msra.mxu0 0
    %1579 = vmatprep.subr.bf16.mxu0 0
    %1580 = vmatpush2.bf16.msra.mxu0 0
    %1581 = vmatprep.mubr.bf16.mxu0 0
    %1582 = vmatmul.mubr.bf16.gmra.mxu0 %v1547
    %v1583 = vpop.f32.mrf.mxu0
    %v1584 = vadd.f32 0.0, %v1583
    %v1585 = vpop.f32.mrf.mxu0
    %v1586 = vpop.f32.mrf.mxu0
    %v1587 = vadd.f32 0.0, %v1586
    %v1588 = vpop.f32.mrf.mxu0
    %1589 = vdwg.mxu0
    %1592 = vrot.lane.b32.xlu0 %v1584, 64
    %v1593 = vpop.permute.xlu0 %1592
    %1594 = vrot.lane.b32.xlu0 %v1587, 64
    %v1595 = vpop.permute.xlu0 %1594
    %v1598 = vsel %vm356, %v1536, %v1593
    %v1599 = vsel %vm356, %v1539, %v1595
    %v1600 = vpack.c.bf16 %v1599, %v1598
    %v1601 = vld [vmem:[%s1078 + $0xc0] sm:$0xf]
    %v1602 = vld [vmem:[%s1078 + $0xcc] sm:$0xf]
    %v1603 = vld [vmem:[%s1078 + $0xd8] sm:$0xf]
    %v1604 = vld [vmem:[%s1078 + $0xe4] sm:$0xf]
    %v1605 = vld [vmem:[%s1078 + $0xf0] sm:$0xf]
    %v1606 = vld [vmem:[%s1078 + $0xfc] sm:$0xf]
    %v1607 = vld [vmem:[%s1078 + $0x108] sm:$0xf]
    %v1608 = vld [vmem:[%s1078 + $0x114] sm:$0xf]
    %v1609 = vld [vmem:[%s1078 + $0x120] sm:$0xf]
    %v1610 = vld [vmem:[%s1078 + $0x12c] sm:$0xf]
    %v1611 = vld [vmem:[%s1078 + $0x138] sm:$0xf]
    %v1612 = vld [vmem:[%s1078 + $0x144] sm:$0xf]
    %v1613 = vld [vmem:[%s1078 + $0x150] sm:$0xf]
    %v1614 = vld [vmem:[%s1078 + $0x15c] sm:$0xf]
    %v1615 = vld [vmem:[%s1078 + $0x168] sm:$0xf]
    %v1616 = vld [vmem:[%s1078 + $0x174] sm:$0xf]
    %v1617 = vlaneseq
    %v1618 = vshrl.u32 %v1617, 7
    %v1619 = vsub.s32 3, %v1618
    %v1620 = vrot.slane %v1075, %v1619
    %v1637 = vunpack.c.l.b16 %v1601
    %v1638 = vunpack.c.l.b16 %v1602
    %v1639 = vunpack.c.l.b16 %v1603
    %v1640 = vunpack.c.l.b16 %v1604
    %v1641 = vunpack.c.l.b16 %v1605
    %v1642 = vunpack.c.l.b16 %v1606
    %v1643 = vunpack.c.l.b16 %v1607
    %v1644 = vunpack.c.l.b16 %v1608
    %v1645 = vunpack.c.l.b16 %v1609
    %v1646 = vunpack.c.l.b16 %v1610
    %v1647 = vunpack.c.l.b16 %v1611
    %v1648 = vunpack.c.l.b16 %v1612
    %v1649 = vunpack.c.l.b16 %v1613
    %v1650 = vunpack.c.l.b16 %v1614
    %v1651 = vunpack.c.l.b16 %v1615
    %v1652 = vunpack.c.l.b16 %v1616
    %v1653 = vpack.c.b16 %v1638, %v1637
    %v1654 = vpack.c.b16 %v1640, %v1639
    %v1655 = vpack.c.b16 %v1642, %v1641
    %v1656 = vpack.c.b16 %v1644, %v1643
    %v1657 = vpack.c.b16 %v1646, %v1645
    %v1658 = vpack.c.b16 %v1648, %v1647
    %v1659 = vpack.c.b16 %v1650, %v1649
    %v1660 = vpack.c.b16 %v1652, %v1651
    %1669 = vmatprep.subr.bf16.mxu0 0
    %1670 = vmatpush1.bf16.msra.mxu0 %v1660
    %1671 = vmatprep.subr.bf16.mxu0 0
    %1672 = vmatpush1.bf16.msra.mxu0 %v1659
    %1673 = vmatprep.subr.bf16.mxu0 0
    %1674 = vmatpush1.bf16.msra.mxu0 %v1658
    %1675 = vmatprep.subr.bf16.mxu0 0
    %1676 = vmatpush1.bf16.msra.mxu0 %v1657
    %1677 = vmatprep.subr.bf16.mxu0 0
    %1678 = vmatpush1.bf16.msra.mxu0 %v1656
    %1679 = vmatprep.subr.bf16.mxu0 0
    %1680 = vmatpush1.bf16.msra.mxu0 %v1655
    %1681 = vmatprep.subr.bf16.mxu0 0
    %1682 = vmatpush1.bf16.msra.mxu0 %v1654
    %1683 = vmatprep.subr.bf16.mxu0 0
    %1684 = vmatpush1.bf16.msra.mxu0 %v1653
    %1685 = vmatprep.subr.bf16.mxu0 0
    %1686 = vmatpush2.bf16.msra.mxu0 0
    %1687 = vmatprep.subr.bf16.mxu0 0
    %1688 = vmatpush2.bf16.msra.mxu0 0
    %1689 = vmatprep.subr.bf16.mxu0 0
    %1690 = vmatpush2.bf16.msra.mxu0 0
    %1691 = vmatprep.subr.bf16.mxu0 0
    %1692 = vmatpush2.bf16.msra.mxu0 0
    %1693 = vmatprep.subr.bf16.mxu0 0
    %1694 = vmatpush2.bf16.msra.mxu0 0
    %1695 = vmatprep.subr.bf16.mxu0 0
    %1696 = vmatpush2.bf16.msra.mxu0 0
    %1697 = vmatprep.subr.bf16.mxu0 0
    %1698 = vmatpush2.bf16.msra.mxu0 0
    %1699 = vmatprep.subr.bf16.mxu0 0
    %1700 = vmatpush2.bf16.msra.mxu0 0
    %1701 = vmatprep.mubr.bf16.mxu0 0
    %1702 = vmatmul.mubr.bf16.gmra.mxu0 %v1600
    %v1703 = vpop.f32.mrf.mxu0
    %v1704 = vadd.f32 %v1620, %v1703
    %v1705 = vpop.f32.mrf.mxu0
    %v1706 = vpop.f32.mrf.mxu0
    %v1707 = vadd.f32 %v1620, %v1706
    %v1708 = vpop.f32.mrf.mxu0
    %1709 = vdwg.mxu0
    %v1710 = vadd.f32 %v1704, %v1072
    %v1711 = vadd.f32 %v1707, %v1073
    %1712 = vadd.xlane.f32.xlu0 %v1710
    %v1713 = vpop.xlane.xlu0 %1712
    %1714 = vadd.xlane.f32.xlu0 %v1711
    %v1715 = vpop.xlane.xlu0 %1714
    %v1716 = vmul.f32 %v1713, 0.03125
    %v1717 = vmul.f32 %v1715, 0.03125
    %v1718 = vsub.f32 %v1710, %v1716
    %v1719 = vsub.f32 %v1711, %v1717
    %v1720 = vmul.f32 %v1718, %v44
    %v1721 = vmul.f32 %v1719, %v44
    %v1722 = vmul.f32 %v1720, %v1720
    %v1723 = vmul.f32 %v1721, %v1721
    %1724 = vadd.xlane.f32.xlu0 %v1722
    %v1725 = vpop.xlane.xlu0 %1724
    %1726 = vadd.xlane.f32.xlu0 %v1723
    %v1727 = vpop.xlane.xlu0 %1726
    %v1728 = vmul.f32 %v1725, 0.03125
    %v1729 = vmul.f32 %v1727, 0.03125
    %v1730 = vadd.f32 %v1728, 1e-05
    %v1731 = vadd.f32 %v1729, 1e-05
    %v1732 = vrsqrt.pop %v1730
    %v1733 = vrsqrt.pop %v1731
    %v1734 = vmul.f32 %v1720, %v1732
    %v1735 = vmul.f32 %v1721, %v1733
    %v1736 = vlaneseq
    %v1737 = vshrl.u32 %v1736, 7
    %v1738 = vsub.s32 4, %v1737
    %v1739 = vrot.slane %v1075, %v1738
    %v1740 = vmul.f32 %v1734, %v1739
    %v1741 = vmul.f32 %v1735, %v1739
    %v1742 = vlaneseq
    %v1743 = vshrl.u32 %v1742, 7
    %v1744 = vsub.s32 5, %v1743
    %v1745 = vrot.slane %v1075, %v1744
    %v1746 = vadd.f32 %v1740, %v1745
    %v1747 = vadd.f32 %v1741, %v1745
    %v1748 = vpack.c.bf16 %v1747, %v1746
    %v1749 = vld [vmem:[%s1078 + $0xc4] sm:$0xf]
    %v1750 = vld [vmem:[%s1078 + $0xd0] sm:$0xf]
    %v1751 = vld [vmem:[%s1078 + $0xdc] sm:$0xf]
    %v1752 = vld [vmem:[%s1078 + $0xe8] sm:$0xf]
    %v1753 = vld [vmem:[%s1078 + $0xf4] sm:$0xf]
    %v1754 = vld [vmem:[%s1078 + $0x100] sm:$0xf]
    %v1755 = vld [vmem:[%s1078 + $0x10c] sm:$0xf]
    %v1756 = vld [vmem:[%s1078 + $0x118] sm:$0xf]
    %v1757 = vld [vmem:[%s1078 + $0x124] sm:$0xf]
    %v1758 = vld [vmem:[%s1078 + $0x130] sm:$0xf]
    %v1759 = vld [vmem:[%s1078 + $0x13c] sm:$0xf]
    %v1760 = vld [vmem:[%s1078 + $0x148] sm:$0xf]
    %v1761 = vld [vmem:[%s1078 + $0x154] sm:$0xf]
    %v1762 = vld [vmem:[%s1078 + $0x160] sm:$0xf]
    %v1763 = vld [vmem:[%s1078 + $0x16c] sm:$0xf]
    %v1764 = vld [vmem:[%s1078 + $0x178] sm:$0xf]
    %v1765 = vlaneseq
    %v1766 = vshrl.u32 %v1765, 7
    %v1767 = vsub.s32 6, %v1766
    %v1768 = vrot.slane %v1075, %v1767
    %v1785 = vunpack.c.l.b16 %v1749
    %v1786 = vunpack.c.l.b16 %v1750
    %v1787 = vunpack.c.l.b16 %v1751
    %v1788 = vunpack.c.l.b16 %v1752
    %v1789 = vunpack.c.l.b16 %v1753
    %v1790 = vunpack.c.l.b16 %v1754
    %v1791 = vunpack.c.l.b16 %v1755
    %v1792 = vunpack.c.l.b16 %v1756
    %v1793 = vunpack.c.l.b16 %v1757
    %v1794 = vunpack.c.l.b16 %v1758
    %v1795 = vunpack.c.l.b16 %v1759
    %v1796 = vunpack.c.l.b16 %v1760
    %v1797 = vunpack.c.l.b16 %v1761
    %v1798 = vunpack.c.l.b16 %v1762
    %v1799 = vunpack.c.l.b16 %v1763
    %v1800 = vunpack.c.l.b16 %v1764
    %v1801 = vpack.c.b16 %v1786, %v1785
    %v1802 = vpack.c.b16 %v1788, %v1787
    %v1803 = vpack.c.b16 %v1790, %v1789
    %v1804 = vpack.c.b16 %v1792, %v1791
    %v1805 = vpack.c.b16 %v1794, %v1793
    %v1806 = vpack.c.b16 %v1796, %v1795
    %v1807 = vpack.c.b16 %v1798, %v1797
    %v1808 = vpack.c.b16 %v1800, %v1799
    %1817 = vmatprep.subr.bf16.mxu0 0
    %1818 = vmatpush1.bf16.msra.mxu0 %v1808
    %1819 = vmatprep.subr.bf16.mxu0 0
    %1820 = vmatpush1.bf16.msra.mxu0 %v1807
    %1821 = vmatprep.subr.bf16.mxu0 0
    %1822 = vmatpush1.bf16.msra.mxu0 %v1806
    %1823 = vmatprep.subr.bf16.mxu0 0
    %1824 = vmatpush1.bf16.msra.mxu0 %v1805
    %1825 = vmatprep.subr.bf16.mxu0 0
    %1826 = vmatpush1.bf16.msra.mxu0 %v1804
    %1827 = vmatprep.subr.bf16.mxu0 0
    %1828 = vmatpush1.bf16.msra.mxu0 %v1803
    %1829 = vmatprep.subr.bf16.mxu0 0
    %1830 = vmatpush1.bf16.msra.mxu0 %v1802
    %1831 = vmatprep.subr.bf16.mxu0 0
    %1832 = vmatpush1.bf16.msra.mxu0 %v1801
    %1833 = vmatprep.subr.bf16.mxu0 0
    %1834 = vmatpush2.bf16.msra.mxu0 0
    %1835 = vmatprep.subr.bf16.mxu0 0
    %1836 = vmatpush2.bf16.msra.mxu0 0
    %1837 = vmatprep.subr.bf16.mxu0 0
    %1838 = vmatpush2.bf16.msra.mxu0 0
    %1839 = vmatprep.subr.bf16.mxu0 0
    %1840 = vmatpush2.bf16.msra.mxu0 0
    %1841 = vmatprep.subr.bf16.mxu0 0
    %1842 = vmatpush2.bf16.msra.mxu0 0
    %1843 = vmatprep.subr.bf16.mxu0 0
    %1844 = vmatpush2.bf16.msra.mxu0 0
    %1845 = vmatprep.subr.bf16.mxu0 0
    %1846 = vmatpush2.bf16.msra.mxu0 0
    %1847 = vmatprep.subr.bf16.mxu0 0
    %1848 = vmatpush2.bf16.msra.mxu0 0
    %1849 = vmatprep.mubr.bf16.mxu0 0
    %1850 = vmatmul.mubr.bf16.gmra.mxu0 %v1748
    %v1851 = vpop.f32.mrf.mxu0
    %v1852 = vadd.f32 %v1768, %v1851
    %v1853 = vpop.f32.mrf.mxu0
    %v1854 = vpop.f32.mrf.mxu0
    %v1855 = vadd.f32 %v1768, %v1854
    %v1856 = vpop.f32.mrf.mxu0
    %1857 = vdwg.mxu0
    %v1858 = vmul.f32 %v1852, 0.5
    %v1859 = vmul.f32 %v1855, 0.5
    %v1860 = vmul.f32 %v1852, 0.70710677
    %v1861 = vmul.f32 %v1855, 0.70710677
    %vm1862 = vcmp.lt.f32.partialorder %v1860, 0.0
    %vm1863 = vcmp.lt.f32.partialorder %v1861, 0.0
    %v1864 = vsel %vm1862, -1.0, 1.0
    %v1865 = vsel %vm1863, -1.0, 1.0
    %v1866 = vand.u32 2147483647, %v1860
    %v1867 = vand.u32 2147483647, %v1861
    %v1868 = vmul.f32 %v1866, 0.3275911
    %v1869 = vmul.f32 %v1867, 0.3275911
    %v1870 = vadd.f32 %v1868, 1.0
    %v1871 = vadd.f32 %v1869, 1.0
    %v1872 = vrcp.pop %v1870
    %v1873 = vmul.f32 1.0, %v1872
    %v1874 = vrcp.pop %v1871
    %v1875 = vmul.f32 1.0, %v1874
    %v1876 = vmul.f32 %v1873, 1.0614054
    %v1877 = vmul.f32 %v1875, 1.0614054
    %v1878 = vadd.f32 %v1876, -1.4531521
    %v1879 = vadd.f32 %v1877, -1.4531521
    %v1880 = vmul.f32 %v1878, %v1873
    %v1881 = vmul.f32 %v1879, %v1875
    %v1882 = vadd.f32 %v1880, 1.4214138
    %v1883 = vadd.f32 %v1881, 1.4214138
    %v1884 = vmul.f32 %v1882, %v1873
    %v1885 = vmul.f32 %v1883, %v1875
    %v1886 = vadd.f32 %v1884, -0.28449672
    %v1887 = vadd.f32 %v1885, -0.28449672
    %v1888 = vmul.f32 %v1886, %v1873
    %v1889 = vmul.f32 %v1887, %v1875
    %v1890 = vadd.f32 %v1888, 0.2548296
    %v1891 = vadd.f32 %v1889, 0.2548296
    %v1892 = vmul.f32 %v1890, %v1873
    %v1893 = vmul.f32 %v1891, %v1875
    %v1894 = vsub.f32 0.0, %v1866
    %v1895 = vsub.f32 0.0, %v1867
    %v1896 = vmul.f32 %v1894, %v1866
    %v1897 = vmul.f32 %v1895, %v1867
    %v1898 = vmul.f32 %v1896, 1.442695
    %v1899 = vpow.pop %v1898
    %v1900 = vmul.f32 %v1897, 1.442695
    %v1901 = vpow.pop %v1900
    %v1902 = vmul.f32 %v1892, %v1899
    %v1903 = vmul.f32 %v1893, %v1901
    %v1904 = vsub.f32 1.0, %v1902
    %v1905 = vsub.f32 1.0, %v1903
    %v1906 = vmul.f32 %v1864, %v1904
    %v1907 = vmul.f32 %v1865, %v1905
    %v1908 = vadd.f32 %v1906, 1.0
    %v1909 = vadd.f32 %v1907, 1.0
    %v1910 = vmul.f32 %v1858, %v1908
    %v1911 = vmul.f32 %v1859, %v1909
    %v1912 = vpack.c.bf16 %v1911, %v1910
    %v1913 = vld [vmem:[%s1078 + $0xc8] sm:$0xf]
    %v1914 = vld [vmem:[%s1078 + $0xd4] sm:$0xf]
    %v1915 = vld [vmem:[%s1078 + $0xe0] sm:$0xf]
    %v1916 = vld [vmem:[%s1078 + $0xec] sm:$0xf]
    %v1917 = vld [vmem:[%s1078 + $0xf8] sm:$0xf]
    %v1918 = vld [vmem:[%s1078 + $0x104] sm:$0xf]
    %v1919 = vld [vmem:[%s1078 + $0x110] sm:$0xf]
    %v1920 = vld [vmem:[%s1078 + $0x11c] sm:$0xf]
    %v1921 = vld [vmem:[%s1078 + $0x128] sm:$0xf]
    %v1922 = vld [vmem:[%s1078 + $0x134] sm:$0xf]
    %v1923 = vld [vmem:[%s1078 + $0x140] sm:$0xf]
    %v1924 = vld [vmem:[%s1078 + $0x14c] sm:$0xf]
    %v1925 = vld [vmem:[%s1078 + $0x158] sm:$0xf]
    %v1926 = vld [vmem:[%s1078 + $0x164] sm:$0xf]
    %v1927 = vld [vmem:[%s1078 + $0x170] sm:$0xf]
    %v1928 = vld [vmem:[%s1078 + $0x17c] sm:$0xf]
    %v1929 = vlaneseq
    %v1930 = vshrl.u32 %v1929, 7
    %v1931 = vsub.s32 7, %v1930
    %v1932 = vrot.slane %v1075, %v1931
    %v1949 = vunpack.c.l.b16 %v1913
    %v1950 = vunpack.c.l.b16 %v1914
    %v1951 = vunpack.c.l.b16 %v1915
    %v1952 = vunpack.c.l.b16 %v1916
    %v1953 = vunpack.c.l.b16 %v1917
    %v1954 = vunpack.c.l.b16 %v1918
    %v1955 = vunpack.c.l.b16 %v1919
    %v1956 = vunpack.c.l.b16 %v1920
    %v1957 = vunpack.c.l.b16 %v1921
    %v1958 = vunpack.c.l.b16 %v1922
    %v1959 = vunpack.c.l.b16 %v1923
    %v1960 = vunpack.c.l.b16 %v1924
    %v1961 = vunpack.c.l.b16 %v1925
    %v1962 = vunpack.c.l.b16 %v1926
    %v1963 = vunpack.c.l.b16 %v1927
    %v1964 = vunpack.c.l.b16 %v1928
    %v1965 = vpack.c.b16 %v1950, %v1949
    %v1966 = vpack.c.b16 %v1952, %v1951
    %v1967 = vpack.c.b16 %v1954, %v1953
    %v1968 = vpack.c.b16 %v1956, %v1955
    %v1969 = vpack.c.b16 %v1958, %v1957
    %v1970 = vpack.c.b16 %v1960, %v1959
    %v1971 = vpack.c.b16 %v1962, %v1961
    %v1972 = vpack.c.b16 %v1964, %v1963
    %1981 = vmatprep.subr.bf16.mxu0 0
    %1982 = vmatpush1.bf16.msra.mxu0 %v1972
    %1983 = vmatprep.subr.bf16.mxu0 0
    %1984 = vmatpush1.bf16.msra.mxu0 %v1971
    %1985 = vmatprep.subr.bf16.mxu0 0
    %1986 = vmatpush1.bf16.msra.mxu0 %v1970
    %1987 = vmatprep.subr.bf16.mxu0 0
    %1988 = vmatpush1.bf16.msra.mxu0 %v1969
    %1989 = vmatprep.subr.bf16.mxu0 0
    %1990 = vmatpush1.bf16.msra.mxu0 %v1968
    %1991 = vmatprep.subr.bf16.mxu0 0
    %1992 = vmatpush1.bf16.msra.mxu0 %v1967
    %1993 = vmatprep.subr.bf16.mxu0 0
    %1994 = vmatpush1.bf16.msra.mxu0 %v1966
    %1995 = vmatprep.subr.bf16.mxu0 0
    %1996 = vmatpush1.bf16.msra.mxu0 %v1965
    %1997 = vmatprep.subr.bf16.mxu0 0
    %1998 = vmatpush2.bf16.msra.mxu0 0
    %1999 = vmatprep.subr.bf16.mxu0 0
    %2000 = vmatpush2.bf16.msra.mxu0 0
    %2001 = vmatprep.subr.bf16.mxu0 0
    %2002 = vmatpush2.bf16.msra.mxu0 0
    %2003 = vmatprep.subr.bf16.mxu0 0
    %2004 = vmatpush2.bf16.msra.mxu0 0
    %2005 = vmatprep.subr.bf16.mxu0 0
    %2006 = vmatpush2.bf16.msra.mxu0 0
    %2007 = vmatprep.subr.bf16.mxu0 0
    %2008 = vmatpush2.bf16.msra.mxu0 0
    %2009 = vmatprep.subr.bf16.mxu0 0
    %2010 = vmatpush2.bf16.msra.mxu0 0
    %2011 = vmatprep.subr.bf16.mxu0 0
    %2012 = vmatpush2.bf16.msra.mxu0 0
    %2013 = vmatprep.mubr.bf16.mxu0 0
    %2014 = vmatmul.mubr.bf16.gmra.mxu0 %v1912
    %v2015 = vpop.f32.mrf.mxu0
    %v2016 = vadd.f32 %v1932, %v2015
    %v2017 = vpop.f32.mrf.mxu0
    %v2018 = vpop.f32.mrf.mxu0
    %v2019 = vadd.f32 %v1932, %v2018
    %v2020 = vpop.f32.mrf.mxu0
    %2021 = vdwg.mxu0
    %v2022 = vadd.f32 %v2016, %v1746
    %v2023 = vadd.f32 %v2019, %v1747
    %2024 = vadd.xlane.f32.xlu0 %v2022
    %v2025 = vpop.xlane.xlu0 %2024
    %2026 = vadd.xlane.f32.xlu0 %v2023
    %v2027 = vpop.xlane.xlu0 %2026
    %v2028 = vmul.f32 %v2025, 0.03125
    %v2029 = vmul.f32 %v2027, 0.03125
    %v2030 = vsub.f32 %v2022, %v2028
    %v2031 = vsub.f32 %v2023, %v2029
    %v2032 = vmul.f32 %v2030, %v44
    %v2033 = vmul.f32 %v2031, %v44
    %v2034 = vmul.f32 %v2032, %v2032
    %v2035 = vmul.f32 %v2033, %v2033
    %2036 = vadd.xlane.f32.xlu0 %v2034
    %v2037 = vpop.xlane.xlu0 %2036
    %2038 = vadd.xlane.f32.xlu0 %v2035
    %v2039 = vpop.xlane.xlu0 %2038
    %v2040 = vmul.f32 %v2037, 0.03125
    %v2041 = vmul.f32 %v2039, 0.03125
    %v2042 = vadd.f32 %v2040, 1e-05
    %v2043 = vadd.f32 %v2041, 1e-05
    %v2044 = vrsqrt.pop %v2042
    %v2045 = vrsqrt.pop %v2043
    %v2046 = vmul.f32 %v2032, %v2044
    %v2047 = vmul.f32 %v2033, %v2045
    %v2048 = vlaneseq
    %v2049 = vshrl.u32 %v2048, 7
    %v2050 = vsub.s32 0, %v2049
    %v2051 = vrot.slane %v1076, %v2050
    %v2052 = vmul.f32 %v2046, %v2051
    %v2053 = vmul.f32 %v2047, %v2051
    %v2054 = vlaneseq
    %v2055 = vshrl.u32 %v2054, 7
    %v2056 = vsub.s32 1, %v2055
    %v2057 = vrot.slane %v1076, %v2056
    %v2058 = vadd.f32 %v2052, %v2057
    %v2059 = vadd.f32 %v2053, %v2057
    %2060 = vst [vmem:[%s6] sm:$0xff] %v2058
    %2061 = vst [vmem:[%s6 + $0x8] sm:$0xff] %v2059
    %v2063 = vrot.slane %v2059, 7
    %vm2065 = vcmask 1040384
    %v2066 = vsel %vm2065, %v2058, %v2063
    %vm2067 = vcmask 1041408
    %v2068 = vsel %vm2067, %v2066, 0.0
    %v2069 = vld [vmem:[%s3] sm:$0xff]
    %v2070 = vld [vmem:[%s3 + $0x8] sm:$0xff]
    %v2071 = vld [vmem:[%s3 + $0x10] sm:$0xff]
    %v2072 = vld [vmem:[%s3 + $0x18] sm:$0xff]
    %v2073 = vld [vmem:[%s3 + $0x20] sm:$0xff]
    %v2074 = vld [vmem:[%s3 + $0x28] sm:$0xff]
    %v2075 = vld [vmem:[%s3 + $0x30] sm:$0xff]
    %v2076 = vld [vmem:[%s3 + $0x38] sm:$0xff]
    %v2077 = vld [vmem:[%s3 + $0x40] sm:$0xff]
    %v2078 = vld [vmem:[%s3 + $0x48] sm:$0xff]
    %v2079 = vld [vmem:[%s3 + $0x50] sm:$0xff]
    %v2080 = vld [vmem:[%s3 + $0x58] sm:$0xff]
    %v2081 = vld [vmem:[%s3 + $0x60] sm:$0xff]
    %v2082 = vld [vmem:[%s3 + $0x68] sm:$0xff]
    %v2083 = vld [vmem:[%s3 + $0x70] sm:$0xff]
    %v2084 = vld [vmem:[%s3 + $0x78] sm:$0xff]
    %v2085 = vld [vmem:[%s3 + $0x80] sm:$0x1]
    %v2086 = vlaneseq
    %v2087 = vshrl.u32 %v2086, 7
    %v2088 = vsub.s32 0, %v2087
    %v2089 = vrot.slane %v2085, %v2088
    %2090 = vmatprep.subr.mxu0 0.0
    %2091 = vmatpush1.msra.mxu0 %v2084
    %2092 = vmatprep.subr.mxu0 0.0
    %2093 = vmatpush1.msra.mxu0 %v2083
    %2094 = vmatprep.subr.mxu0 0.0
    %2095 = vmatpush1.msra.mxu0 %v2082
    %2096 = vmatprep.subr.mxu0 0.0
    %2097 = vmatpush1.msra.mxu0 %v2081
    %2098 = vmatprep.subr.mxu0 0.0
    %2099 = vmatpush1.msra.mxu0 %v2080
    %2100 = vmatprep.subr.mxu0 0.0
    %2101 = vmatpush1.msra.mxu0 %v2079
    %2102 = vmatprep.subr.mxu0 0.0
    %2103 = vmatpush1.msra.mxu0 %v2078
    %2104 = vmatprep.subr.mxu0 0.0
    %2105 = vmatpush1.msra.mxu0 %v2077
    %2106 = vmatprep.subr.mxu0 0.0
    %2107 = vmatpush1.msra.mxu0 %v2076
    %2108 = vmatprep.subr.mxu0 0.0
    %2109 = vmatpush1.msra.mxu0 %v2075
    %2110 = vmatprep.subr.mxu0 0.0
    %2111 = vmatpush1.msra.mxu0 %v2074
    %2112 = vmatprep.subr.mxu0 0.0
    %2113 = vmatpush1.msra.mxu0 %v2073
    %2114 = vmatprep.subr.mxu0 0.0
    %2115 = vmatpush1.msra.mxu0 %v2072
    %2116 = vmatprep.subr.mxu0 0.0
    %2117 = vmatpush1.msra.mxu0 %v2071
    %2118 = vmatprep.subr.mxu0 0.0
    %2119 = vmatpush1.msra.mxu0 %v2070
    %2120 = vmatprep.subr.mxu0 0.0
    %2121 = vmatpush1.msra.mxu0 %v2069
    %2122 = vmatprep.subr.mxu0 0.0
    %2123 = vmatpush2.msra.mxu0 0.0
    %2124 = vmatprep.subr.mxu0 0.0
    %2125 = vmatpush2.msra.mxu0 0.0
    %2126 = vmatprep.subr.mxu0 0.0
    %2127 = vmatpush2.msra.mxu0 0.0
    %2128 = vmatprep.subr.mxu0 0.0
    %2129 = vmatpush2.msra.mxu0 0.0
    %2130 = vmatprep.subr.mxu0 0.0
    %2131 = vmatpush2.msra.mxu0 0.0
    %2132 = vmatprep.subr.mxu0 0.0
    %2133 = vmatpush2.msra.mxu0 0.0
    %2134 = vmatprep.subr.mxu0 0.0
    %2135 = vmatpush2.msra.mxu0 0.0
    %2136 = vmatprep.subr.mxu0 0.0
    %2137 = vmatpush2.msra.mxu0 0.0
    %2138 = vmatprep.subr.mxu0 0.0
    %2139 = vmatpush2.msra.mxu0 0.0
    %2140 = vmatprep.subr.mxu0 0.0
    %2141 = vmatpush2.msra.mxu0 0.0
    %2142 = vmatprep.subr.mxu0 0.0
    %2143 = vmatpush2.msra.mxu0 0.0
    %2144 = vmatprep.subr.mxu0 0.0
    %2145 = vmatpush2.msra.mxu0 0.0
    %2146 = vmatprep.subr.mxu0 0.0
    %2147 = vmatpush2.msra.mxu0 0.0
    %2148 = vmatprep.subr.mxu0 0.0
    %2149 = vmatpush2.msra.mxu0 0.0
    %2150 = vmatprep.subr.mxu0 0.0
    %2151 = vmatpush2.msra.mxu0 0.0
    %2152 = vmatprep.subr.mxu0 0.0
    %2153 = vmatpush2.msra.mxu0 0.0
    %2154 = vmatprep.mubr.f32.mxu0 0.0
    %2155 = vmatmul.mubr.f32.gmra.mxu0 %v2068
    %v2156 = vpop.f32.mrf.mxu0
    %v2157 = vadd.f32 %v2089, %v2156
    %v2158 = vpop.f32.mrf.mxu0
    %2159 = vdwg.mxu0
    %v2160 = vtanh.pop %v2157
    %2161 = vst [vmem:[%s7] sm:$0xff] %v2160
    // Predicated region
    $region30: #{roberta_forward.1} parent=1 // pred_check
      _
    $region31: #{roberta_forward.1} parent=1 // pred_check_branch
      %2163 = sbr.rel (0) target = $region33
    $region32: #{roberta_forward.1} parent=1 // pred_region
      _
    $region33: #{roberta_forward.1} parent=1 // pred_fallthru
      _
    // Predicated region
    $region34: #{roberta_forward.1} parent=1 // pred_check
      _
    $region35: #{roberta_forward.1} parent=1 // pred_check_branch
      %2165 = sbr.rel (0) target = $region37
    $region36: #{roberta_forward.1} parent=1 // pred_region
      _
    $region37: #{roberta_forward.1} parent=1 // pred_fallthru
      _
    // Predicated region
    $region38: #{roberta_forward.1} parent=1 // pred_check
      _
    $region39: #{roberta_forward.1} parent=1 // pred_check_branch
      %2167 = sbr.rel (0) target = $region41
    $region40: #{roberta_forward.1} parent=1 // pred_region
      _
    $region41: #{roberta_forward.1} parent=1 // pred_fallthru
      _
    // Predicated region
    $region42: #{roberta_forward.1} parent=1 // pred_check
      _
    $region43: #{roberta_forward.1} parent=1 // pred_check_branch
      %2169 = sbr.rel (0) target = $region45
    $region44: #{roberta_forward.1} parent=1 // pred_region
      _
    $region45: #{roberta_forward.1} parent=1 // pred_fallthru
      _
    %2170 = vsyncpa [#allocation3], 1

</llo_original>
